<compile_context>
chip_gen: v5e
topology: v5e:2x2
jax: 0.10.0
libtpu: 0.0.40
codegen_flags: <defaults>
</compile_context>

<pallas_src>
import functools

import jax
import jax.numpy as jnp
from jax.experimental import pallas as pl
from jax.experimental.pallas import tpu as pltpu

BN_EPS = 1e-5
_SQRT_HALF = 0.7071067811865476
_HIGH = jax.lax.Precision.HIGHEST


# ---------------------------------------------------------------------------
# In-kernel math helpers
# ---------------------------------------------------------------------------
def _erf(x):
    # TODO(synk): lax.erf has no guaranteed Mosaic lowering; exact-GELU's erf
    # is implemented with Abramowitz & Stegun 7.1.26 (|abs err| < 1.5e-7).
    a1, a2, a3, a4, a5 = (0.254829592, -0.284496736, 1.421413741,
                          -1.453152027, 1.061405429)
    p = 0.3275911
    sgn = jnp.where(x >= 0.0, 1.0, -1.0)
    ax = jnp.abs(x)
    t = 1.0 / (1.0 + p * ax)
    poly = t * (a1 + t * (a2 + t * (a3 + t * (a4 + t * a5))))
    return sgn * (1.0 - poly * jnp.exp(-ax * ax))


def _gelu_exact(x):
    # nn.GELU() default = exact (erf-based) GELU.
    return 0.5 * x * (1.0 + _erf(x * _SQRT_HALF))


# ---------------------------------------------------------------------------
# Fused kernel
#
# Lane layout for every slab: per image a (Ho+2) x (Wo+2) zero-padded block
# flattened into lanes (real data at rows/cols [1:Ho+1, 1:Wo+1]), N blocks
# concatenated, then zero-padded to LZ (multiple of 128, with >= Wp+1 zero
# tail lanes).  Every 3x3 conv tap for ALL outputs is the same slab circularly
# rotated by a constant lane amount (wrap-around always lands in zeros), so a
# conv is 9 accumulated (Cout x Cin) @ (Cin x LZ) MXU matmuls.
# ---------------------------------------------------------------------------
def resconv_fused_kernel(x_ref, mask_ref, w1t_ref, b1_ref, g1_ref, be1_ref,
                         g2_ref, be2_ref, w2t_ref, wskt_ref, bout_ref,
                         out_ref, *, wp, n_in, n_out, residual):
    f32 = jnp.float32
    bf16 = jnp.bfloat16
    Co, LZ = out_ref.shape
    Cin = x_ref.shape[1]

    mask = mask_ref[...]                               # (1, LZ), 1.0 at real lanes

    # ---- Stage 1: BN1 (training batch stats over N*H*W) + exact GELU -------
    # x arrives as 4 stride-2 phase planes, each lane-dense (Cin, LZ); padding
    # lanes are zero so plain lane-sums equal sums over the real elements.
    xs = [x_ref[p] for p in range(4)]                  # each (Cin, LZ) f32
    s = jnp.zeros((Cin, 1), f32)
    sq = jnp.zeros((Cin, 1), f32)
    for p in range(4):
        s = s + jnp.sum(xs[p], axis=1, keepdims=True)
        sq = sq + jnp.sum(xs[p] * xs[p], axis=1, keepdims=True)
    inv_n = 1.0 / n_in
    mean1 = s * inv_n
    var1 = sq * inv_n - mean1 * mean1
    scale1 = g1_ref[...] * jax.lax.rsqrt(var1 + BN_EPS)   # hoisted, reused below
    shift1 = be1_ref[...] - mean1 * scale1
    # mask -> restore exact zeros at conv-padding / tail lanes.
    y1 = [_gelu_exact(xs[p] * scale1 + shift1) * mask for p in range(4)]

    def tap(plane, off):
        # tap[l] = plane[l + off]; circular wrap always lands in zero lanes
        # because LZ - L >= wp + 1 and the slab ends with zero padding rows.
        if off == 0:
            return plane
        return pltpu.roll(plane, (-off) % LZ, axis=1)

    # ---- Stage 2: 3x3 stride-2 conv (9 matmuls over phase planes) + BN2+GELU
    # ky==1 -> even-row phase, row offset 0; ky==0 -> odd phase, offset -1;
    # ky==2 -> odd phase, offset 0  (same for kx / columns).
    h = jnp.zeros((Co, LZ), f32)
    for dy in range(3):
        for dx in range(3):
            ph = (0 if dy == 1 else 1) * 2 + (0 if dx == 1 else 1)
            off = -((1 if dy == 0 else 0) * wp + (1 if dx == 0 else 0))
            t = tap(y1[ph], off).astype(bf16)              # (Cin, LZ) bf16
            h = h + jnp.dot(w1t_ref[dy * 3 + dx], t,
                            preferred_element_type=f32)
    h = h + b1_ref[...]

    inv_m = 1.0 / n_out
    mean2 = jnp.sum(h * mask, axis=1, keepdims=True) * inv_m   # real lanes only
    hc = h - mean2
    var2 = jnp.sum(hc * hc * mask, axis=1, keepdims=True) * inv_m
    scale2 = g2_ref[...] * jax.lax.rsqrt(var2 + BN_EPS)
    y2 = _gelu_exact(hc * scale2 + be2_ref[...]) * mask        # (Co, LZ), zeros at pad

    # ---- Stage 3: 3x3 stride-1 conv + fused 1x1 stride-2 skip conv ----------
    if residual:
        # skip conv reads raw x at even/even positions == phase plane 0.
        out = jnp.dot(wskt_ref[...], xs[0].astype(bf16),
                      preferred_element_type=f32)
    else:
        out = jnp.zeros((Co, LZ), f32)
    for dy in range(3):
        for dx in range(3):
            off = (dy - 1) * wp + (dx - 1)
            t = tap(y2, off).astype(bf16)                      # (Co, LZ) bf16
            out = out + jnp.dot(w2t_ref[dy * 3 + dx], t,
                                preferred_element_type=f32)
    out_ref[...] = out + bout_ref[...]                         # b2 (+ bsk) pre-summed


# ---------------------------------------------------------------------------
# pallas_call plumbing (tiny shapes -> single grid step, full-array blocks)
# TODO(synk): at production sizes, tile the lane axis (two-pass BN partial
#             sums) and mark it "parallel" for megacore; single step is
#             optimal at these toy shapes.
# ---------------------------------------------------------------------------
def _full_spec(shape):
    nd = len(shape)
    return pl.BlockSpec(shape, lambda *_, _nd=nd: (0,) * _nd)


# ---------------------------------------------------------------------------
# ResConv forward (Pallas)
# ---------------------------------------------------------------------------
def resconv_forward(x_nchw, params, *, stride=2, residual=True):
    if stride != 2:
        # TODO(synk): stride!=2 needs a different tap layout (no space-to-depth);
        # the module config under test uses stride=2.
        raise NotImplementedError("fused kernel is specialized to stride=2")

    x = x_nchw.astype(jnp.float32)
    N, Cin, H, W = x.shape
    Co = params["w1"].shape[-1]
    Ho, Wo = H // 2, W // 2
    Hp, Wp = Ho + 2, Wo + 2                      # per-image zero-padded block
    block = Hp * Wp
    L = N * block                                # real lane length of every slab
    # lane length padded to a multiple of 128 with >= Wp+1 zero tail lanes so
    # circular rolls wrap into zeros.
    LZ = ((L + (Wp + 1) + 127) // 128) * 128

    # --- wrapper glue: space-to-depth phase planes of x, lane-dense (pure data
    #     movement; no 9x im2col materialization, no per-stage HBM traffic) ----
    xt = jnp.transpose(x, (1, 0, 2, 3))                          # (Cin, N, H, W)
    xp6 = xt.reshape(Cin, N, Ho, 2, Wo, 2)
    xp6 = jnp.transpose(xp6, (3, 5, 0, 1, 2, 4))                 # (2,2,Cin,N,Ho,Wo)
    planes = jnp.zeros((2, 2, Cin, N, Hp, Wp), jnp.float32)
    planes = planes.at[:, :, :, :, 1:Ho + 1, 1:Wo + 1].set(xp6)
    xph = planes.reshape(4, Cin, L)                              # phase p = py*2+px
    xph = jnp.pad(xph, ((0, 0), (0, 0), (0, LZ - L)))            # (4, Cin, LZ)

    mask = jnp.zeros((N, Hp, Wp), jnp.float32)
    mask = mask.at[:, 1:Ho + 1, 1:Wo + 1].set(1.0).reshape(1, L)
    mask = jnp.pad(mask, ((0, 0), (0, LZ - L)))                  # (1, LZ)

    # Weights transposed for (Cout, Cin) @ (Cin, LZ) matmuls; bf16 MXU operands.
    w1t = jnp.transpose(params["w1"], (0, 1, 3, 2)).reshape(9, Co, Cin).astype(jnp.bfloat16)
    w2t = jnp.transpose(params["w2"], (0, 1, 3, 2)).reshape(9, Co, Co).astype(jnp.bfloat16)
    wskt = jnp.transpose(params["wsk"].reshape(Cin, Co)).astype(jnp.bfloat16)
    b1 = params["b1"].reshape(Co, 1).astype(jnp.float32)
    g1 = params["gamma1"].reshape(Cin, 1).astype(jnp.float32)
    be1 = params["beta1"].reshape(Cin, 1).astype(jnp.float32)
    g2 = params["gamma2"].reshape(Co, 1).astype(jnp.float32)
    be2 = params["beta2"].reshape(Co, 1).astype(jnp.float32)
    bout = params["b2"] + (params["bsk"] if residual else 0.0)
    bout = bout.reshape(Co, 1).astype(jnp.float32)

    kern = functools.partial(resconv_fused_kernel, wp=Wp,
                             n_in=N * H * W, n_out=N * Ho * Wo,
                             residual=residual)
    inputs = (xph, mask, w1t, b1, g1, be1, g2, be2, w2t, wskt, bout)

    out_full = pl.pallas_call(
        kern,
        grid=(1,),
        in_specs=[_full_spec(a.shape) for a in inputs],
        out_specs=_full_spec((Co, LZ)),
        out_shape=jax.ShapeDtypeStruct((Co, LZ), jnp.float32),
        compiler_params=pltpu.CompilerParams(dimension_semantics=("arbitrary",)),
    )(*inputs)

    # glue: strip per-image padding + tail, back to NCHW
    out = out_full[:, :L].reshape(Co, N, Hp, Wp)[:, :, 1:Ho + 1, 1:Wo + 1]
    return jnp.transpose(out, (1, 0, 2, 3))


# ---------------------------------------------------------------------------
# Pure-JAX reference (f32, HIGHEST precision) for numerical sanity check
# ---------------------------------------------------------------------------
def resconv_reference(x_nchw, params, *, stride, residual=True):
    x = x_nchw.astype(jnp.float32)

    def bn(x, gamma, beta):
        mean = jnp.mean(x, axis=(0, 2, 3), keepdims=True)
        var = jnp.mean((x - mean) ** 2, axis=(0, 2, 3), keepdims=True)
        xhat = (x - mean) * jax.lax.rsqrt(var + BN_EPS)
        return xhat * gamma.reshape(1, -1, 1, 1) + beta.reshape(1, -1, 1, 1)

    def conv(x, w_hwio, b, s, pad):
        out = jax.lax.conv_general_dilated(
            x, w_hwio, (s, s), [(pad, pad), (pad, pad)],
            dimension_numbers=("NCHW", "HWIO", "NCHW"), precision=_HIGH)
        return out + b.reshape(1, -1, 1, 1)

    g = lambda v: jax.nn.gelu(v, approximate=False)
    h = conv(g(bn(x, params["gamma1"], params["beta1"])),
             params["w1"], params["b1"], stride, 1)
    main = conv(g(bn(h, params["gamma2"], params["beta2"])),
                params["w2"], params["b2"], 1, 1)
    if residual:
        main = main + conv(x, params["wsk"], params["bsk"], stride, 0)
    return main


# ---------------------------------------------------------------------------
if __name__ == "__main__":
    N, Cin, H, W = 2, 4, 16, 16
    Co, stride = 8, 2

    key = jax.random.PRNGKey(0)
    ks = jax.random.split(key, 11)
    x = jax.random.normal(ks[0], (N, Cin, H, W), jnp.float32)
    params = dict(
        gamma1=1.0 + 0.1 * jax.random.normal(ks[1], (Cin,), jnp.float32),
        beta1=0.1 * jax.random.normal(ks[2], (Cin,), jnp.float32),
        w1=0.2 * jax.random.normal(ks[3], (3, 3, Cin, Co), jnp.float32),
        b1=0.1 * jax.random.normal(ks[4], (Co,), jnp.float32),
        gamma2=1.0 + 0.1 * jax.random.normal(ks[5], (Co,), jnp.float32),
        beta2=0.1 * jax.random.normal(ks[6], (Co,), jnp.float32),
        w2=0.2 * jax.random.normal(ks[7], (3, 3, Co, Co), jnp.float32),
        b2=0.1 * jax.random.normal(ks[8], (Co,), jnp.float32),
        wsk=0.2 * jax.random.normal(ks[9], (1, 1, Cin, Co), jnp.float32),
        bsk=0.1 * jax.random.normal(ks[10], (Co,), jnp.float32),
    )

    out = resconv_forward(x, params, stride=stride, residual=True)
    out = jax.block_until_ready(out)

    assert out.shape == (N, Co, H // stride, W // stride)
    ref = resconv_reference(x, params, stride=stride, residual=True)
    # bf16 MXU operands with f32 accumulation vs f32/HIGHEST reference
    # -> tolerance relaxed accordingly.
    assert jnp.allclose(out, ref, atol=4e-2, rtol=4e-2), float(
        jnp.max(jnp.abs(out - ref)))

    print("KERNEL_OK")
</pallas_src>

<mosaic_0001>
module attributes {stable_mosaic.version = 11 : i64} {
  func.func @resconv_fused_kernel(%arg0: i32, %arg1: memref<4x4x256xf32, #tpu.memory_space<vmem>>, %arg2: memref<1x256xf32, #tpu.memory_space<vmem>>, %arg3: memref<9x8x4xbf16, #tpu.memory_space<vmem>>, %arg4: memref<8x1xf32, #tpu.memory_space<vmem>>, %arg5: memref<4x1xf32, #tpu.memory_space<vmem>>, %arg6: memref<4x1xf32, #tpu.memory_space<vmem>>, %arg7: memref<8x1xf32, #tpu.memory_space<vmem>>, %arg8: memref<8x1xf32, #tpu.memory_space<vmem>>, %arg9: memref<9x8x8xbf16, #tpu.memory_space<vmem>>, %arg10: memref<8x4xbf16, #tpu.memory_space<vmem>>, %arg11: memref<8x1xf32, #tpu.memory_space<vmem>>, %arg12: memref<8x256xf32, #tpu.memory_space<vmem>>) attributes {dimension_semantics = [#tpu.dimension_semantics<arbitrary>], iteration_bounds = array<i64: 1>, scalar_prefetch = 0 : i64, scratch_operands = 0 : i64, tpu.core_type = #tpu.core_type<tc>, window_params = [{pipeline_mode = #tpu.pipeline_mode<synchronous>, transform_indices = @transform_0, window_bounds = array<i64: 4, 4, 256>}, {pipeline_mode = #tpu.pipeline_mode<synchronous>, transform_indices = @transform_1, window_bounds = array<i64: 1, 256>}, {pipeline_mode = #tpu.pipeline_mode<synchronous>, transform_indices = @transform_2, window_bounds = array<i64: 9, 8, 4>}, {pipeline_mode = #tpu.pipeline_mode<synchronous>, transform_indices = @transform_3, window_bounds = array<i64: 8, 1>}, {pipeline_mode = #tpu.pipeline_mode<synchronous>, transform_indices = @transform_4, window_bounds = array<i64: 4, 1>}, {pipeline_mode = #tpu.pipeline_mode<synchronous>, transform_indices = @transform_5, window_bounds = array<i64: 4, 1>}, {pipeline_mode = #tpu.pipeline_mode<synchronous>, transform_indices = @transform_6, window_bounds = array<i64: 8, 1>}, {pipeline_mode = #tpu.pipeline_mode<synchronous>, transform_indices = @transform_7, window_bounds = array<i64: 8, 1>}, {pipeline_mode = #tpu.pipeline_mode<synchronous>, transform_indices = @transform_8, window_bounds = array<i64: 9, 8, 8>}, {pipeline_mode = #tpu.pipeline_mode<synchronous>, transform_indices = @transform_9, window_bounds = array<i64: 8, 4>}, {pipeline_mode = #tpu.pipeline_mode<synchronous>, transform_indices = @transform_10, window_bounds = array<i64: 8, 1>}, {pipeline_mode = #tpu.pipeline_mode<synchronous>, transform_indices = @transform_11, window_bounds = array<i64: 8, 256>}]} {
    %c0 = arith.constant 0 : index
    %c0_0 = arith.constant 0 : index
    %0 = vector.load %arg2[%c0, %c0_0] : memref<1x256xf32, #tpu.memory_space<vmem>>, vector<1x256xf32>
    %c0_1 = arith.constant 0 : index
    %c0_2 = arith.constant 0 : index
    %c0_3 = arith.constant 0 : index
    %1 = vector.load %arg1[%c0_1, %c0_2, %c0_3] : memref<4x4x256xf32, #tpu.memory_space<vmem>>, vector<1x4x256xf32>
    %2 = vector.shape_cast %1 : vector<1x4x256xf32> to vector<4x256xf32>
    %c1 = arith.constant 1 : index
    %c0_4 = arith.constant 0 : index
    %c0_5 = arith.constant 0 : index
    %3 = vector.load %arg1[%c1, %c0_4, %c0_5] : memref<4x4x256xf32, #tpu.memory_space<vmem>>, vector<1x4x256xf32>
    %4 = vector.shape_cast %3 : vector<1x4x256xf32> to vector<4x256xf32>
    %c2 = arith.constant 2 : index
    %c0_6 = arith.constant 0 : index
    %c0_7 = arith.constant 0 : index
    %5 = vector.load %arg1[%c2, %c0_6, %c0_7] : memref<4x4x256xf32, #tpu.memory_space<vmem>>, vector<1x4x256xf32>
    %6 = vector.shape_cast %5 : vector<1x4x256xf32> to vector<4x256xf32>
    %c3 = arith.constant 3 : index
    %c0_8 = arith.constant 0 : index
    %c0_9 = arith.constant 0 : index
    %7 = vector.load %arg1[%c3, %c0_8, %c0_9] : memref<4x4x256xf32, #tpu.memory_space<vmem>>, vector<1x4x256xf32>
    %8 = vector.shape_cast %7 : vector<1x4x256xf32> to vector<4x256xf32>
    %cst = arith.constant 0.000000e+00 : f32
    %9 = vector.broadcast %cst : f32 to vector<4x1xf32>
    %cst_10 = arith.constant 0.000000e+00 : f32
    %10 = vector.broadcast %cst_10 : f32 to vector<4x1xf32>
    %cst_11 = arith.constant dense<0.000000e+00> : vector<4xf32>
    %11 = vector.multi_reduction <add>, %2, %cst_11 [1] : vector<4x256xf32> to vector<4xf32>
    %12 = vector.shape_cast %11 : vector<4xf32> to vector<4x1xf32>
    %13 = arith.addf %9, %12 : vector<4x1xf32>
    %14 = arith.mulf %2, %2 : vector<4x256xf32>
    %cst_12 = arith.constant dense<0.000000e+00> : vector<4xf32>
    %15 = vector.multi_reduction <add>, %14, %cst_12 [1] : vector<4x256xf32> to vector<4xf32>
    %16 = vector.shape_cast %15 : vector<4xf32> to vector<4x1xf32>
    %17 = arith.addf %10, %16 : vector<4x1xf32>
    %cst_13 = arith.constant dense<0.000000e+00> : vector<4xf32>
    %18 = vector.multi_reduction <add>, %4, %cst_13 [1] : vector<4x256xf32> to vector<4xf32>
    %19 = vector.shape_cast %18 : vector<4xf32> to vector<4x1xf32>
    %20 = arith.addf %13, %19 : vector<4x1xf32>
    %21 = arith.mulf %4, %4 : vector<4x256xf32>
    %cst_14 = arith.constant dense<0.000000e+00> : vector<4xf32>
    %22 = vector.multi_reduction <add>, %21, %cst_14 [1] : vector<4x256xf32> to vector<4xf32>
    %23 = vector.shape_cast %22 : vector<4xf32> to vector<4x1xf32>
    %24 = arith.addf %17, %23 : vector<4x1xf32>
    %cst_15 = arith.constant dense<0.000000e+00> : vector<4xf32>
    %25 = vector.multi_reduction <add>, %6, %cst_15 [1] : vector<4x256xf32> to vector<4xf32>
    %26 = vector.shape_cast %25 : vector<4xf32> to vector<4x1xf32>
    %27 = arith.addf %20, %26 : vector<4x1xf32>
    %28 = arith.mulf %6, %6 : vector<4x256xf32>
    %cst_16 = arith.constant dense<0.000000e+00> : vector<4xf32>
    %29 = vector.multi_reduction <add>, %28, %cst_16 [1] : vector<4x256xf32> to vector<4xf32>
    %30 = vector.shape_cast %29 : vector<4xf32> to vector<4x1xf32>
    %31 = arith.addf %24, %30 : vector<4x1xf32>
    %cst_17 = arith.constant dense<0.000000e+00> : vector<4xf32>
    %32 = vector.multi_reduction <add>, %8, %cst_17 [1] : vector<4x256xf32> to vector<4xf32>
    %33 = vector.shape_cast %32 : vector<4xf32> to vector<4x1xf32>
    %34 = arith.addf %27, %33 : vector<4x1xf32>
    %35 = arith.mulf %8, %8 : vector<4x256xf32>
    %cst_18 = arith.constant dense<0.000000e+00> : vector<4xf32>
    %36 = vector.multi_reduction <add>, %35, %cst_18 [1] : vector<4x256xf32> to vector<4xf32>
    %37 = vector.shape_cast %36 : vector<4xf32> to vector<4x1xf32>
    %38 = arith.addf %31, %37 : vector<4x1xf32>
    %cst_19 = arith.constant 0.001953125 : f32
    %39 = vector.broadcast %cst_19 : f32 to vector<4x1xf32>
    %40 = arith.mulf %34, %39 : vector<4x1xf32>
    %cst_20 = arith.constant 0.001953125 : f32
    %41 = vector.broadcast %cst_20 : f32 to vector<4x1xf32>
    %42 = arith.mulf %38, %41 : vector<4x1xf32>
    %43 = arith.mulf %40, %40 : vector<4x1xf32>
    %44 = arith.subf %42, %43 : vector<4x1xf32>
    %c0_21 = arith.constant 0 : index
    %c0_22 = arith.constant 0 : index
    %45 = vector.load %arg5[%c0_21, %c0_22] : memref<4x1xf32, #tpu.memory_space<vmem>>, vector<4x1xf32>
    %cst_23 = arith.constant 9.99999974E-6 : f32
    %46 = vector.broadcast %cst_23 : f32 to vector<4x1xf32>
    %47 = arith.addf %44, %46 : vector<4x1xf32>
    %48 = math.rsqrt %47 : vector<4x1xf32>
    %49 = arith.mulf %45, %48 : vector<4x1xf32>
    %c0_24 = arith.constant 0 : index
    %c0_25 = arith.constant 0 : index
    %50 = vector.load %arg6[%c0_24, %c0_25] : memref<4x1xf32, #tpu.memory_space<vmem>>, vector<4x1xf32>
    %51 = arith.mulf %40, %49 : vector<4x1xf32>
    %52 = arith.subf %50, %51 : vector<4x1xf32>
    %53 = vector.broadcast %49 : vector<4x1xf32> to vector<4x256xf32>
    %54 = arith.mulf %2, %53 : vector<4x256xf32>
    %55 = vector.broadcast %52 : vector<4x1xf32> to vector<4x256xf32>
    %56 = arith.addf %54, %55 : vector<4x256xf32>
    %cst_26 = arith.constant 5.000000e-01 : f32
    %57 = vector.broadcast %cst_26 : f32 to vector<4x256xf32>
    %58 = arith.mulf %57, %56 : vector<4x256xf32>
    %cst_27 = arith.constant 0.707106769 : f32
    %59 = vector.broadcast %cst_27 : f32 to vector<4x256xf32>
    %60 = arith.mulf %56, %59 : vector<4x256xf32>
    %cst_28 = arith.constant 0.000000e+00 : f32
    %61 = vector.broadcast %cst_28 : f32 to vector<4x256xf32>
    %62 = arith.cmpf oge, %60, %61 : vector<4x256xf32>
    %cst_29 = arith.constant 1.000000e+00 : f32
    %cst_30 = arith.constant -1.000000e+00 : f32
    %63 = vector.broadcast %cst_29 : f32 to vector<4x256xf32>
    %64 = vector.broadcast %cst_30 : f32 to vector<4x256xf32>
    %65 = arith.select %62, %63, %64 : vector<4x256xi1>, vector<4x256xf32>
    %66 = math.absf %60 : vector<4x256xf32>
    %cst_31 = arith.constant 0.327591091 : f32
    %67 = vector.broadcast %cst_31 : f32 to vector<4x256xf32>
    %68 = arith.mulf %67, %66 : vector<4x256xf32>
    %cst_32 = arith.constant 1.000000e+00 : f32
    %69 = vector.broadcast %cst_32 : f32 to vector<4x256xf32>
    %70 = arith.addf %69, %68 : vector<4x256xf32>
    %cst_33 = arith.constant 1.000000e+00 : f32
    %71 = vector.broadcast %cst_33 : f32 to vector<4x256xf32>
    %72 = arith.divf %71, %70 : vector<4x256xf32>
    %cst_34 = arith.constant 1.06140542 : f32
    %73 = vector.broadcast %cst_34 : f32 to vector<4x256xf32>
    %74 = arith.mulf %72, %73 : vector<4x256xf32>
    %cst_35 = arith.constant -1.45315206 : f32
    %75 = vector.broadcast %cst_35 : f32 to vector<4x256xf32>
    %76 = arith.addf %75, %74 : vector<4x256xf32>
    %77 = arith.mulf %72, %76 : vector<4x256xf32>
    %cst_36 = arith.constant 1.42141378 : f32
    %78 = vector.broadcast %cst_36 : f32 to vector<4x256xf32>
    %79 = arith.addf %78, %77 : vector<4x256xf32>
    %80 = arith.mulf %72, %79 : vector<4x256xf32>
    %cst_37 = arith.constant -0.284496725 : f32
    %81 = vector.broadcast %cst_37 : f32 to vector<4x256xf32>
    %82 = arith.addf %81, %80 : vector<4x256xf32>
    %83 = arith.mulf %72, %82 : vector<4x256xf32>
    %cst_38 = arith.constant 0.254829586 : f32
    %84 = vector.broadcast %cst_38 : f32 to vector<4x256xf32>
    %85 = arith.addf %84, %83 : vector<4x256xf32>
    %86 = arith.mulf %72, %85 : vector<4x256xf32>
    %cst_39 = arith.constant 0.000000e+00 : f32
    %87 = vector.broadcast %cst_39 : f32 to vector<4x256xf32>
    %88 = arith.subf %87, %66 : vector<4x256xf32>
    %89 = arith.mulf %88, %66 : vector<4x256xf32>
    %90 = math.exp %89 : vector<4x256xf32>
    %91 = arith.mulf %86, %90 : vector<4x256xf32>
    %cst_40 = arith.constant 1.000000e+00 : f32
    %92 = vector.broadcast %cst_40 : f32 to vector<4x256xf32>
    %93 = arith.subf %92, %91 : vector<4x256xf32>
    %94 = arith.mulf %65, %93 : vector<4x256xf32>
    %cst_41 = arith.constant 1.000000e+00 : f32
    %95 = vector.broadcast %cst_41 : f32 to vector<4x256xf32>
    %96 = arith.addf %95, %94 : vector<4x256xf32>
    %97 = arith.mulf %58, %96 : vector<4x256xf32>
    %98 = vector.broadcast %0 : vector<1x256xf32> to vector<4x256xf32>
    %99 = arith.mulf %97, %98 : vector<4x256xf32>
    %100 = vector.broadcast %49 : vector<4x1xf32> to vector<4x256xf32>
    %101 = arith.mulf %4, %100 : vector<4x256xf32>
    %102 = vector.broadcast %52 : vector<4x1xf32> to vector<4x256xf32>
    %103 = arith.addf %101, %102 : vector<4x256xf32>
    %cst_42 = arith.constant 5.000000e-01 : f32
    %104 = vector.broadcast %cst_42 : f32 to vector<4x256xf32>
    %105 = arith.mulf %104, %103 : vector<4x256xf32>
    %cst_43 = arith.constant 0.707106769 : f32
    %106 = vector.broadcast %cst_43 : f32 to vector<4x256xf32>
    %107 = arith.mulf %103, %106 : vector<4x256xf32>
    %cst_44 = arith.constant 0.000000e+00 : f32
    %108 = vector.broadcast %cst_44 : f32 to vector<4x256xf32>
    %109 = arith.cmpf oge, %107, %108 : vector<4x256xf32>
    %cst_45 = arith.constant 1.000000e+00 : f32
    %cst_46 = arith.constant -1.000000e+00 : f32
    %110 = vector.broadcast %cst_45 : f32 to vector<4x256xf32>
    %111 = vector.broadcast %cst_46 : f32 to vector<4x256xf32>
    %112 = arith.select %109, %110, %111 : vector<4x256xi1>, vector<4x256xf32>
    %113 = math.absf %107 : vector<4x256xf32>
    %cst_47 = arith.constant 0.327591091 : f32
    %114 = vector.broadcast %cst_47 : f32 to vector<4x256xf32>
    %115 = arith.mulf %114, %113 : vector<4x256xf32>
    %cst_48 = arith.constant 1.000000e+00 : f32
    %116 = vector.broadcast %cst_48 : f32 to vector<4x256xf32>
    %117 = arith.addf %116, %115 : vector<4x256xf32>
    %cst_49 = arith.constant 1.000000e+00 : f32
    %118 = vector.broadcast %cst_49 : f32 to vector<4x256xf32>
    %119 = arith.divf %118, %117 : vector<4x256xf32>
    %cst_50 = arith.constant 1.06140542 : f32
    %120 = vector.broadcast %cst_50 : f32 to vector<4x256xf32>
    %121 = arith.mulf %119, %120 : vector<4x256xf32>
    %cst_51 = arith.constant -1.45315206 : f32
    %122 = vector.broadcast %cst_51 : f32 to vector<4x256xf32>
    %123 = arith.addf %122, %121 : vector<4x256xf32>
    %124 = arith.mulf %119, %123 : vector<4x256xf32>
    %cst_52 = arith.constant 1.42141378 : f32
    %125 = vector.broadcast %cst_52 : f32 to vector<4x256xf32>
    %126 = arith.addf %125, %124 : vector<4x256xf32>
    %127 = arith.mulf %119, %126 : vector<4x256xf32>
    %cst_53 = arith.constant -0.284496725 : f32
    %128 = vector.broadcast %cst_53 : f32 to vector<4x256xf32>
    %129 = arith.addf %128, %127 : vector<4x256xf32>
    %130 = arith.mulf %119, %129 : vector<4x256xf32>
    %cst_54 = arith.constant 0.254829586 : f32
    %131 = vector.broadcast %cst_54 : f32 to vector<4x256xf32>
    %132 = arith.addf %131, %130 : vector<4x256xf32>
    %133 = arith.mulf %119, %132 : vector<4x256xf32>
    %cst_55 = arith.constant 0.000000e+00 : f32
    %134 = vector.broadcast %cst_55 : f32 to vector<4x256xf32>
    %135 = arith.subf %134, %113 : vector<4x256xf32>
    %136 = arith.mulf %135, %113 : vector<4x256xf32>
    %137 = math.exp %136 : vector<4x256xf32>
    %138 = arith.mulf %133, %137 : vector<4x256xf32>
    %cst_56 = arith.constant 1.000000e+00 : f32
    %139 = vector.broadcast %cst_56 : f32 to vector<4x256xf32>
    %140 = arith.subf %139, %138 : vector<4x256xf32>
    %141 = arith.mulf %112, %140 : vector<4x256xf32>
    %cst_57 = arith.constant 1.000000e+00 : f32
    %142 = vector.broadcast %cst_57 : f32 to vector<4x256xf32>
    %143 = arith.addf %142, %141 : vector<4x256xf32>
    %144 = arith.mulf %105, %143 : vector<4x256xf32>
    %145 = vector.broadcast %0 : vector<1x256xf32> to vector<4x256xf32>
    %146 = arith.mulf %144, %145 : vector<4x256xf32>
    %147 = vector.broadcast %49 : vector<4x1xf32> to vector<4x256xf32>
    %148 = arith.mulf %6, %147 : vector<4x256xf32>
    %149 = vector.broadcast %52 : vector<4x1xf32> to vector<4x256xf32>
    %150 = arith.addf %148, %149 : vector<4x256xf32>
    %cst_58 = arith.constant 5.000000e-01 : f32
    %151 = vector.broadcast %cst_58 : f32 to vector<4x256xf32>
    %152 = arith.mulf %151, %150 : vector<4x256xf32>
    %cst_59 = arith.constant 0.707106769 : f32
    %153 = vector.broadcast %cst_59 : f32 to vector<4x256xf32>
    %154 = arith.mulf %150, %153 : vector<4x256xf32>
    %cst_60 = arith.constant 0.000000e+00 : f32
    %155 = vector.broadcast %cst_60 : f32 to vector<4x256xf32>
    %156 = arith.cmpf oge, %154, %155 : vector<4x256xf32>
    %cst_61 = arith.constant 1.000000e+00 : f32
    %cst_62 = arith.constant -1.000000e+00 : f32
    %157 = vector.broadcast %cst_61 : f32 to vector<4x256xf32>
    %158 = vector.broadcast %cst_62 : f32 to vector<4x256xf32>
    %159 = arith.select %156, %157, %158 : vector<4x256xi1>, vector<4x256xf32>
    %160 = math.absf %154 : vector<4x256xf32>
    %cst_63 = arith.constant 0.327591091 : f32
    %161 = vector.broadcast %cst_63 : f32 to vector<4x256xf32>
    %162 = arith.mulf %161, %160 : vector<4x256xf32>
    %cst_64 = arith.constant 1.000000e+00 : f32
    %163 = vector.broadcast %cst_64 : f32 to vector<4x256xf32>
    %164 = arith.addf %163, %162 : vector<4x256xf32>
    %cst_65 = arith.constant 1.000000e+00 : f32
    %165 = vector.broadcast %cst_65 : f32 to vector<4x256xf32>
    %166 = arith.divf %165, %164 : vector<4x256xf32>
    %cst_66 = arith.constant 1.06140542 : f32
    %167 = vector.broadcast %cst_66 : f32 to vector<4x256xf32>
    %168 = arith.mulf %166, %167 : vector<4x256xf32>
    %cst_67 = arith.constant -1.45315206 : f32
    %169 = vector.broadcast %cst_67 : f32 to vector<4x256xf32>
    %170 = arith.addf %169, %168 : vector<4x256xf32>
    %171 = arith.mulf %166, %170 : vector<4x256xf32>
    %cst_68 = arith.constant 1.42141378 : f32
    %172 = vector.broadcast %cst_68 : f32 to vector<4x256xf32>
    %173 = arith.addf %172, %171 : vector<4x256xf32>
    %174 = arith.mulf %166, %173 : vector<4x256xf32>
    %cst_69 = arith.constant -0.284496725 : f32
    %175 = vector.broadcast %cst_69 : f32 to vector<4x256xf32>
    %176 = arith.addf %175, %174 : vector<4x256xf32>
    %177 = arith.mulf %166, %176 : vector<4x256xf32>
    %cst_70 = arith.constant 0.254829586 : f32
    %178 = vector.broadcast %cst_70 : f32 to vector<4x256xf32>
    %179 = arith.addf %178, %177 : vector<4x256xf32>
    %180 = arith.mulf %166, %179 : vector<4x256xf32>
    %cst_71 = arith.constant 0.000000e+00 : f32
    %181 = vector.broadcast %cst_71 : f32 to vector<4x256xf32>
    %182 = arith.subf %181, %160 : vector<4x256xf32>
    %183 = arith.mulf %182, %160 : vector<4x256xf32>
    %184 = math.exp %183 : vector<4x256xf32>
    %185 = arith.mulf %180, %184 : vector<4x256xf32>
    %cst_72 = arith.constant 1.000000e+00 : f32
    %186 = vector.broadcast %cst_72 : f32 to vector<4x256xf32>
    %187 = arith.subf %186, %185 : vector<4x256xf32>
    %188 = arith.mulf %159, %187 : vector<4x256xf32>
    %cst_73 = arith.constant 1.000000e+00 : f32
    %189 = vector.broadcast %cst_73 : f32 to vector<4x256xf32>
    %190 = arith.addf %189, %188 : vector<4x256xf32>
    %191 = arith.mulf %152, %190 : vector<4x256xf32>
    %192 = vector.broadcast %0 : vector<1x256xf32> to vector<4x256xf32>
    %193 = arith.mulf %191, %192 : vector<4x256xf32>
    %194 = vector.broadcast %49 : vector<4x1xf32> to vector<4x256xf32>
    %195 = arith.mulf %8, %194 : vector<4x256xf32>
    %196 = vector.broadcast %52 : vector<4x1xf32> to vector<4x256xf32>
    %197 = arith.addf %195, %196 : vector<4x256xf32>
    %cst_74 = arith.constant 5.000000e-01 : f32
    %198 = vector.broadcast %cst_74 : f32 to vector<4x256xf32>
    %199 = arith.mulf %198, %197 : vector<4x256xf32>
    %cst_75 = arith.constant 0.707106769 : f32
    %200 = vector.broadcast %cst_75 : f32 to vector<4x256xf32>
    %201 = arith.mulf %197, %200 : vector<4x256xf32>
    %cst_76 = arith.constant 0.000000e+00 : f32
    %202 = vector.broadcast %cst_76 : f32 to vector<4x256xf32>
    %203 = arith.cmpf oge, %201, %202 : vector<4x256xf32>
    %cst_77 = arith.constant 1.000000e+00 : f32
    %cst_78 = arith.constant -1.000000e+00 : f32
    %204 = vector.broadcast %cst_77 : f32 to vector<4x256xf32>
    %205 = vector.broadcast %cst_78 : f32 to vector<4x256xf32>
    %206 = arith.select %203, %204, %205 : vector<4x256xi1>, vector<4x256xf32>
    %207 = math.absf %201 : vector<4x256xf32>
    %cst_79 = arith.constant 0.327591091 : f32
    %208 = vector.broadcast %cst_79 : f32 to vector<4x256xf32>
    %209 = arith.mulf %208, %207 : vector<4x256xf32>
    %cst_80 = arith.constant 1.000000e+00 : f32
    %210 = vector.broadcast %cst_80 : f32 to vector<4x256xf32>
    %211 = arith.addf %210, %209 : vector<4x256xf32>
    %cst_81 = arith.constant 1.000000e+00 : f32
    %212 = vector.broadcast %cst_81 : f32 to vector<4x256xf32>
    %213 = arith.divf %212, %211 : vector<4x256xf32>
    %cst_82 = arith.constant 1.06140542 : f32
    %214 = vector.broadcast %cst_82 : f32 to vector<4x256xf32>
    %215 = arith.mulf %213, %214 : vector<4x256xf32>
    %cst_83 = arith.constant -1.45315206 : f32
    %216 = vector.broadcast %cst_83 : f32 to vector<4x256xf32>
    %217 = arith.addf %216, %215 : vector<4x256xf32>
    %218 = arith.mulf %213, %217 : vector<4x256xf32>
    %cst_84 = arith.constant 1.42141378 : f32
    %219 = vector.broadcast %cst_84 : f32 to vector<4x256xf32>
    %220 = arith.addf %219, %218 : vector<4x256xf32>
    %221 = arith.mulf %213, %220 : vector<4x256xf32>
    %cst_85 = arith.constant -0.284496725 : f32
    %222 = vector.broadcast %cst_85 : f32 to vector<4x256xf32>
    %223 = arith.addf %222, %221 : vector<4x256xf32>
    %224 = arith.mulf %213, %223 : vector<4x256xf32>
    %cst_86 = arith.constant 0.254829586 : f32
    %225 = vector.broadcast %cst_86 : f32 to vector<4x256xf32>
    %226 = arith.addf %225, %224 : vector<4x256xf32>
    %227 = arith.mulf %213, %226 : vector<4x256xf32>
    %cst_87 = arith.constant 0.000000e+00 : f32
    %228 = vector.broadcast %cst_87 : f32 to vector<4x256xf32>
    %229 = arith.subf %228, %207 : vector<4x256xf32>
    %230 = arith.mulf %229, %207 : vector<4x256xf32>
    %231 = math.exp %230 : vector<4x256xf32>
    %232 = arith.mulf %227, %231 : vector<4x256xf32>
    %cst_88 = arith.constant 1.000000e+00 : f32
    %233 = vector.broadcast %cst_88 : f32 to vector<4x256xf32>
    %234 = arith.subf %233, %232 : vector<4x256xf32>
    %235 = arith.mulf %206, %234 : vector<4x256xf32>
    %cst_89 = arith.constant 1.000000e+00 : f32
    %236 = vector.broadcast %cst_89 : f32 to vector<4x256xf32>
    %237 = arith.addf %236, %235 : vector<4x256xf32>
    %238 = arith.mulf %199, %237 : vector<4x256xf32>
    %239 = vector.broadcast %0 : vector<1x256xf32> to vector<4x256xf32>
    %240 = arith.mulf %238, %239 : vector<4x256xf32>
    %cst_90 = arith.constant 0.000000e+00 : f32
    %241 = vector.broadcast %cst_90 : f32 to vector<8x256xf32>
    %c11_i32 = arith.constant 11 : i32
    %242 = tpu.dynamic_rotate %240 by %c11_i32 dim 1 : vector<4x256xf32>, i32 -> vector<4x256xf32>
    %243 = arith.truncf %242 : vector<4x256xf32> to vector<4x256xbf16>
    %c0_91 = arith.constant 0 : index
    %c0_92 = arith.constant 0 : index
    %c0_93 = arith.constant 0 : index
    %244 = vector.load %arg3[%c0_91, %c0_92, %c0_93] : memref<9x8x4xbf16, #tpu.memory_space<vmem>>, vector<1x8x4xbf16>
    %245 = vector.shape_cast %244 : vector<1x8x4xbf16> to vector<8x4xbf16>
    %cst_94 = arith.constant dense<0.000000e+00> : vector<8x256xf32>
    %246 = tpu.matmul %245, %243, %cst_94 {dimension_numbers = #tpu.dot_dimension_numbers<[1], [0], [0], [1], [0, 0, 1, 1], [], []>} : vector<8x4xbf16>, vector<4x256xbf16>, vector<8x256xf32> -> vector<8x256xf32>
    %247 = arith.addf %241, %246 : vector<8x256xf32>
    %c10_i32 = arith.constant 10 : i32
    %248 = tpu.dynamic_rotate %193 by %c10_i32 dim 1 : vector<4x256xf32>, i32 -> vector<4x256xf32>
    %249 = arith.truncf %248 : vector<4x256xf32> to vector<4x256xbf16>
    %c1_95 = arith.constant 1 : index
    %c0_96 = arith.constant 0 : index
    %c0_97 = arith.constant 0 : index
    %250 = vector.load %arg3[%c1_95, %c0_96, %c0_97] : memref<9x8x4xbf16, #tpu.memory_space<vmem>>, vector<1x8x4xbf16>
    %251 = vector.shape_cast %250 : vector<1x8x4xbf16> to vector<8x4xbf16>
    %cst_98 = arith.constant dense<0.000000e+00> : vector<8x256xf32>
    %252 = tpu.matmul %251, %249, %cst_98 {dimension_numbers = #tpu.dot_dimension_numbers<[1], [0], [0], [1], [0, 0, 1, 1], [], []>} : vector<8x4xbf16>, vector<4x256xbf16>, vector<8x256xf32> -> vector<8x256xf32>
    %253 = arith.addf %247, %252 : vector<8x256xf32>
    %c10_i32_99 = arith.constant 10 : i32
    %254 = tpu.dynamic_rotate %240 by %c10_i32_99 dim 1 : vector<4x256xf32>, i32 -> vector<4x256xf32>
    %255 = arith.truncf %254 : vector<4x256xf32> to vector<4x256xbf16>
    %c2_100 = arith.constant 2 : index
    %c0_101 = arith.constant 0 : index
    %c0_102 = arith.constant 0 : index
    %256 = vector.load %arg3[%c2_100, %c0_101, %c0_102] : memref<9x8x4xbf16, #tpu.memory_space<vmem>>, vector<1x8x4xbf16>
    %257 = vector.shape_cast %256 : vector<1x8x4xbf16> to vector<8x4xbf16>
    %cst_103 = arith.constant dense<0.000000e+00> : vector<8x256xf32>
    %258 = tpu.matmul %257, %255, %cst_103 {dimension_numbers = #tpu.dot_dimension_numbers<[1], [0], [0], [1], [0, 0, 1, 1], [], []>} : vector<8x4xbf16>, vector<4x256xbf16>, vector<8x256xf32> -> vector<8x256xf32>
    %259 = arith.addf %253, %258 : vector<8x256xf32>
    %c1_i32 = arith.constant 1 : i32
    %260 = tpu.dynamic_rotate %146 by %c1_i32 dim 1 : vector<4x256xf32>, i32 -> vector<4x256xf32>
    %261 = arith.truncf %260 : vector<4x256xf32> to vector<4x256xbf16>
    %c3_104 = arith.constant 3 : index
    %c0_105 = arith.constant 0 : index
    %c0_106 = arith.constant 0 : index
    %262 = vector.load %arg3[%c3_104, %c0_105, %c0_106] : memref<9x8x4xbf16, #tpu.memory_space<vmem>>, vector<1x8x4xbf16>
    %263 = vector.shape_cast %262 : vector<1x8x4xbf16> to vector<8x4xbf16>
    %cst_107 = arith.constant dense<0.000000e+00> : vector<8x256xf32>
    %264 = tpu.matmul %263, %261, %cst_107 {dimension_numbers = #tpu.dot_dimension_numbers<[1], [0], [0], [1], [0, 0, 1, 1], [], []>} : vector<8x4xbf16>, vector<4x256xbf16>, vector<8x256xf32> -> vector<8x256xf32>
    %265 = arith.addf %259, %264 : vector<8x256xf32>
    %266 = arith.truncf %99 : vector<4x256xf32> to vector<4x256xbf16>
    %c4 = arith.constant 4 : index
    %c0_108 = arith.constant 0 : index
    %c0_109 = arith.constant 0 : index
    %267 = vector.load %arg3[%c4, %c0_108, %c0_109] : memref<9x8x4xbf16, #tpu.memory_space<vmem>>, vector<1x8x4xbf16>
    %268 = vector.shape_cast %267 : vector<1x8x4xbf16> to vector<8x4xbf16>
    %cst_110 = arith.constant dense<0.000000e+00> : vector<8x256xf32>
    %269 = tpu.matmul %268, %266, %cst_110 {dimension_numbers = #tpu.dot_dimension_numbers<[1], [0], [0], [1], [0, 0, 1, 1], [], []>} : vector<8x4xbf16>, vector<4x256xbf16>, vector<8x256xf32> -> vector<8x256xf32>
    %270 = arith.addf %265, %269 : vector<8x256xf32>
    %271 = arith.truncf %146 : vector<4x256xf32> to vector<4x256xbf16>
    %c5 = arith.constant 5 : index
    %c0_111 = arith.constant 0 : index
    %c0_112 = arith.constant 0 : index
    %272 = vector.load %arg3[%c5, %c0_111, %c0_112] : memref<9x8x4xbf16, #tpu.memory_space<vmem>>, vector<1x8x4xbf16>
    %273 = vector.shape_cast %272 : vector<1x8x4xbf16> to vector<8x4xbf16>
    %cst_113 = arith.constant dense<0.000000e+00> : vector<8x256xf32>
    %274 = tpu.matmul %273, %271, %cst_113 {dimension_numbers = #tpu.dot_dimension_numbers<[1], [0], [0], [1], [0, 0, 1, 1], [], []>} : vector<8x4xbf16>, vector<4x256xbf16>, vector<8x256xf32> -> vector<8x256xf32>
    %275 = arith.addf %270, %274 : vector<8x256xf32>
    %c1_i32_114 = arith.constant 1 : i32
    %276 = tpu.dynamic_rotate %240 by %c1_i32_114 dim 1 : vector<4x256xf32>, i32 -> vector<4x256xf32>
    %277 = arith.truncf %276 : vector<4x256xf32> to vector<4x256xbf16>
    %c6 = arith.constant 6 : index
    %c0_115 = arith.constant 0 : index
    %c0_116 = arith.constant 0 : index
    %278 = vector.load %arg3[%c6, %c0_115, %c0_116] : memref<9x8x4xbf16, #tpu.memory_space<vmem>>, vector<1x8x4xbf16>
    %279 = vector.shape_cast %278 : vector<1x8x4xbf16> to vector<8x4xbf16>
    %cst_117 = arith.constant dense<0.000000e+00> : vector<8x256xf32>
    %280 = tpu.matmul %279, %277, %cst_117 {dimension_numbers = #tpu.dot_dimension_numbers<[1], [0], [0], [1], [0, 0, 1, 1], [], []>} : vector<8x4xbf16>, vector<4x256xbf16>, vector<8x256xf32> -> vector<8x256xf32>
    %281 = arith.addf %275, %280 : vector<8x256xf32>
    %282 = arith.truncf %193 : vector<4x256xf32> to vector<4x256xbf16>
    %c7 = arith.constant 7 : index
    %c0_118 = arith.constant 0 : index
    %c0_119 = arith.constant 0 : index
    %283 = vector.load %arg3[%c7, %c0_118, %c0_119] : memref<9x8x4xbf16, #tpu.memory_space<vmem>>, vector<1x8x4xbf16>
    %284 = vector.shape_cast %283 : vector<1x8x4xbf16> to vector<8x4xbf16>
    %cst_120 = arith.constant dense<0.000000e+00> : vector<8x256xf32>
    %285 = tpu.matmul %284, %282, %cst_120 {dimension_numbers = #tpu.dot_dimension_numbers<[1], [0], [0], [1], [0, 0, 1, 1], [], []>} : vector<8x4xbf16>, vector<4x256xbf16>, vector<8x256xf32> -> vector<8x256xf32>
    %286 = arith.addf %281, %285 : vector<8x256xf32>
    %287 = arith.truncf %240 : vector<4x256xf32> to vector<4x256xbf16>
    %c8 = arith.constant 8 : index
    %c0_121 = arith.constant 0 : index
    %c0_122 = arith.constant 0 : index
    %288 = vector.load %arg3[%c8, %c0_121, %c0_122] : memref<9x8x4xbf16, #tpu.memory_space<vmem>>, vector<1x8x4xbf16>
    %289 = vector.shape_cast %288 : vector<1x8x4xbf16> to vector<8x4xbf16>
    %cst_123 = arith.constant dense<0.000000e+00> : vector<8x256xf32>
    %290 = tpu.matmul %289, %287, %cst_123 {dimension_numbers = #tpu.dot_dimension_numbers<[1], [0], [0], [1], [0, 0, 1, 1], [], []>} : vector<8x4xbf16>, vector<4x256xbf16>, vector<8x256xf32> -> vector<8x256xf32>
    %291 = arith.addf %286, %290 : vector<8x256xf32>
    %c0_124 = arith.constant 0 : index
    %c0_125 = arith.constant 0 : index
    %292 = vector.load %arg4[%c0_124, %c0_125] : memref<8x1xf32, #tpu.memory_space<vmem>>, vector<8x1xf32>
    %293 = vector.broadcast %292 : vector<8x1xf32> to vector<8x256xf32>
    %294 = arith.addf %291, %293 : vector<8x256xf32>
    %295 = vector.broadcast %0 : vector<1x256xf32> to vector<8x256xf32>
    %296 = arith.mulf %294, %295 : vector<8x256xf32>
    %cst_126 = arith.constant dense<0.000000e+00> : vector<8xf32>
    %297 = vector.multi_reduction <add>, %296, %cst_126 [1] : vector<8x256xf32> to vector<8xf32>
    %298 = vector.shape_cast %297 : vector<8xf32> to vector<8x1xf32>
    %cst_127 = arith.constant 7.812500e-03 : f32
    %299 = vector.broadcast %cst_127 : f32 to vector<8x1xf32>
    %300 = arith.mulf %298, %299 : vector<8x1xf32>
    %301 = vector.broadcast %300 : vector<8x1xf32> to vector<8x256xf32>
    %302 = arith.subf %294, %301 : vector<8x256xf32>
    %303 = arith.mulf %302, %302 : vector<8x256xf32>
    %304 = vector.broadcast %0 : vector<1x256xf32> to vector<8x256xf32>
    %305 = arith.mulf %303, %304 : vector<8x256xf32>
    %cst_128 = arith.constant dense<0.000000e+00> : vector<8xf32>
    %306 = vector.multi_reduction <add>, %305, %cst_128 [1] : vector<8x256xf32> to vector<8xf32>
    %307 = vector.shape_cast %306 : vector<8xf32> to vector<8x1xf32>
    %cst_129 = arith.constant 7.812500e-03 : f32
    %308 = vector.broadcast %cst_129 : f32 to vector<8x1xf32>
    %309 = arith.mulf %307, %308 : vector<8x1xf32>
    %c0_130 = arith.constant 0 : index
    %c0_131 = arith.constant 0 : index
    %310 = vector.load %arg7[%c0_130, %c0_131] : memref<8x1xf32, #tpu.memory_space<vmem>>, vector<8x1xf32>
    %cst_132 = arith.constant 9.99999974E-6 : f32
    %311 = vector.broadcast %cst_132 : f32 to vector<8x1xf32>
    %312 = arith.addf %309, %311 : vector<8x1xf32>
    %313 = math.rsqrt %312 : vector<8x1xf32>
    %314 = arith.mulf %310, %313 : vector<8x1xf32>
    %315 = vector.broadcast %314 : vector<8x1xf32> to vector<8x256xf32>
    %316 = arith.mulf %302, %315 : vector<8x256xf32>
    %c0_133 = arith.constant 0 : index
    %c0_134 = arith.constant 0 : index
    %317 = vector.load %arg8[%c0_133, %c0_134] : memref<8x1xf32, #tpu.memory_space<vmem>>, vector<8x1xf32>
    %318 = vector.broadcast %317 : vector<8x1xf32> to vector<8x256xf32>
    %319 = arith.addf %316, %318 : vector<8x256xf32>
    %cst_135 = arith.constant 5.000000e-01 : f32
    %320 = vector.broadcast %cst_135 : f32 to vector<8x256xf32>
    %321 = arith.mulf %320, %319 : vector<8x256xf32>
    %cst_136 = arith.constant 0.707106769 : f32
    %322 = vector.broadcast %cst_136 : f32 to vector<8x256xf32>
    %323 = arith.mulf %319, %322 : vector<8x256xf32>
    %cst_137 = arith.constant 0.000000e+00 : f32
    %324 = vector.broadcast %cst_137 : f32 to vector<8x256xf32>
    %325 = arith.cmpf oge, %323, %324 : vector<8x256xf32>
    %cst_138 = arith.constant 1.000000e+00 : f32
    %cst_139 = arith.constant -1.000000e+00 : f32
    %326 = vector.broadcast %cst_138 : f32 to vector<8x256xf32>
    %327 = vector.broadcast %cst_139 : f32 to vector<8x256xf32>
    %328 = arith.select %325, %326, %327 : vector<8x256xi1>, vector<8x256xf32>
    %329 = math.absf %323 : vector<8x256xf32>
    %cst_140 = arith.constant 0.327591091 : f32
    %330 = vector.broadcast %cst_140 : f32 to vector<8x256xf32>
    %331 = arith.mulf %330, %329 : vector<8x256xf32>
    %cst_141 = arith.constant 1.000000e+00 : f32
    %332 = vector.broadcast %cst_141 : f32 to vector<8x256xf32>
    %333 = arith.addf %332, %331 : vector<8x256xf32>
    %cst_142 = arith.constant 1.000000e+00 : f32
    %334 = vector.broadcast %cst_142 : f32 to vector<8x256xf32>
    %335 = arith.divf %334, %333 : vector<8x256xf32>
    %cst_143 = arith.constant 1.06140542 : f32
    %336 = vector.broadcast %cst_143 : f32 to vector<8x256xf32>
    %337 = arith.mulf %335, %336 : vector<8x256xf32>
    %cst_144 = arith.constant -1.45315206 : f32
    %338 = vector.broadcast %cst_144 : f32 to vector<8x256xf32>
    %339 = arith.addf %338, %337 : vector<8x256xf32>
    %340 = arith.mulf %335, %339 : vector<8x256xf32>
    %cst_145 = arith.constant 1.42141378 : f32
    %341 = vector.broadcast %cst_145 : f32 to vector<8x256xf32>
    %342 = arith.addf %341, %340 : vector<8x256xf32>
    %343 = arith.mulf %335, %342 : vector<8x256xf32>
    %cst_146 = arith.constant -0.284496725 : f32
    %344 = vector.broadcast %cst_146 : f32 to vector<8x256xf32>
    %345 = arith.addf %344, %343 : vector<8x256xf32>
    %346 = arith.mulf %335, %345 : vector<8x256xf32>
    %cst_147 = arith.constant 0.254829586 : f32
    %347 = vector.broadcast %cst_147 : f32 to vector<8x256xf32>
    %348 = arith.addf %347, %346 : vector<8x256xf32>
    %349 = arith.mulf %335, %348 : vector<8x256xf32>
    %cst_148 = arith.constant 0.000000e+00 : f32
    %350 = vector.broadcast %cst_148 : f32 to vector<8x256xf32>
    %351 = arith.subf %350, %329 : vector<8x256xf32>
    %352 = arith.mulf %351, %329 : vector<8x256xf32>
    %353 = math.exp %352 : vector<8x256xf32>
    %354 = arith.mulf %349, %353 : vector<8x256xf32>
    %cst_149 = arith.constant 1.000000e+00 : f32
    %355 = vector.broadcast %cst_149 : f32 to vector<8x256xf32>
    %356 = arith.subf %355, %354 : vector<8x256xf32>
    %357 = arith.mulf %328, %356 : vector<8x256xf32>
    %cst_150 = arith.constant 1.000000e+00 : f32
    %358 = vector.broadcast %cst_150 : f32 to vector<8x256xf32>
    %359 = arith.addf %358, %357 : vector<8x256xf32>
    %360 = arith.mulf %321, %359 : vector<8x256xf32>
    %361 = vector.broadcast %0 : vector<1x256xf32> to vector<8x256xf32>
    %362 = arith.mulf %360, %361 : vector<8x256xf32>
    %c0_151 = arith.constant 0 : index
    %c0_152 = arith.constant 0 : index
    %363 = vector.load %arg10[%c0_151, %c0_152] : memref<8x4xbf16, #tpu.memory_space<vmem>>, vector<8x4xbf16>
    %364 = arith.truncf %2 : vector<4x256xf32> to vector<4x256xbf16>
    %cst_153 = arith.constant dense<0.000000e+00> : vector<8x256xf32>
    %365 = tpu.matmul %363, %364, %cst_153 {dimension_numbers = #tpu.dot_dimension_numbers<[1], [0], [0], [1], [0, 0, 1, 1], [], []>} : vector<8x4xbf16>, vector<4x256xbf16>, vector<8x256xf32> -> vector<8x256xf32>
    %c11_i32_154 = arith.constant 11 : i32
    %366 = tpu.dynamic_rotate %362 by %c11_i32_154 dim 1 : vector<8x256xf32>, i32 -> vector<8x256xf32>
    %367 = arith.truncf %366 : vector<8x256xf32> to vector<8x256xbf16>
    %c0_155 = arith.constant 0 : index
    %c0_156 = arith.constant 0 : index
    %c0_157 = arith.constant 0 : index
    %368 = vector.load %arg9[%c0_155, %c0_156, %c0_157] : memref<9x8x8xbf16, #tpu.memory_space<vmem>>, vector<1x8x8xbf16>
    %369 = vector.shape_cast %368 : vector<1x8x8xbf16> to vector<8x8xbf16>
    %cst_158 = arith.constant dense<0.000000e+00> : vector<8x256xf32>
    %370 = tpu.matmul %369, %367, %cst_158 {dimension_numbers = #tpu.dot_dimension_numbers<[1], [0], [0], [1], [0, 0, 1, 1], [], []>} : vector<8x8xbf16>, vector<8x256xbf16>, vector<8x256xf32> -> vector<8x256xf32>
    %371 = arith.addf %365, %370 : vector<8x256xf32>
    %c10_i32_159 = arith.constant 10 : i32
    %372 = tpu.dynamic_rotate %362 by %c10_i32_159 dim 1 : vector<8x256xf32>, i32 -> vector<8x256xf32>
    %373 = arith.truncf %372 : vector<8x256xf32> to vector<8x256xbf16>
    %c1_160 = arith.constant 1 : index
    %c0_161 = arith.constant 0 : index
    %c0_162 = arith.constant 0 : index
    %374 = vector.load %arg9[%c1_160, %c0_161, %c0_162] : memref<9x8x8xbf16, #tpu.memory_space<vmem>>, vector<1x8x8xbf16>
    %375 = vector.shape_cast %374 : vector<1x8x8xbf16> to vector<8x8xbf16>
    %cst_163 = arith.constant dense<0.000000e+00> : vector<8x256xf32>
    %376 = tpu.matmul %375, %373, %cst_163 {dimension_numbers = #tpu.dot_dimension_numbers<[1], [0], [0], [1], [0, 0, 1, 1], [], []>} : vector<8x8xbf16>, vector<8x256xbf16>, vector<8x256xf32> -> vector<8x256xf32>
    %377 = arith.addf %371, %376 : vector<8x256xf32>
    %c9_i32 = arith.constant 9 : i32
    %378 = tpu.dynamic_rotate %362 by %c9_i32 dim 1 : vector<8x256xf32>, i32 -> vector<8x256xf32>
    %379 = arith.truncf %378 : vector<8x256xf32> to vector<8x256xbf16>
    %c2_164 = arith.constant 2 : index
    %c0_165 = arith.constant 0 : index
    %c0_166 = arith.constant 0 : index
    %380 = vector.load %arg9[%c2_164, %c0_165, %c0_166] : memref<9x8x8xbf16, #tpu.memory_space<vmem>>, vector<1x8x8xbf16>
    %381 = vector.shape_cast %380 : vector<1x8x8xbf16> to vector<8x8xbf16>
    %cst_167 = arith.constant dense<0.000000e+00> : vector<8x256xf32>
    %382 = tpu.matmul %381, %379, %cst_167 {dimension_numbers = #tpu.dot_dimension_numbers<[1], [0], [0], [1], [0, 0, 1, 1], [], []>} : vector<8x8xbf16>, vector<8x256xbf16>, vector<8x256xf32> -> vector<8x256xf32>
    %383 = arith.addf %377, %382 : vector<8x256xf32>
    %c1_i32_168 = arith.constant 1 : i32
    %384 = tpu.dynamic_rotate %362 by %c1_i32_168 dim 1 : vector<8x256xf32>, i32 -> vector<8x256xf32>
    %385 = arith.truncf %384 : vector<8x256xf32> to vector<8x256xbf16>
    %c3_169 = arith.constant 3 : index
    %c0_170 = arith.constant 0 : index
    %c0_171 = arith.constant 0 : index
    %386 = vector.load %arg9[%c3_169, %c0_170, %c0_171] : memref<9x8x8xbf16, #tpu.memory_space<vmem>>, vector<1x8x8xbf16>
    %387 = vector.shape_cast %386 : vector<1x8x8xbf16> to vector<8x8xbf16>
    %cst_172 = arith.constant dense<0.000000e+00> : vector<8x256xf32>
    %388 = tpu.matmul %387, %385, %cst_172 {dimension_numbers = #tpu.dot_dimension_numbers<[1], [0], [0], [1], [0, 0, 1, 1], [], []>} : vector<8x8xbf16>, vector<8x256xbf16>, vector<8x256xf32> -> vector<8x256xf32>
    %389 = arith.addf %383, %388 : vector<8x256xf32>
    %390 = arith.truncf %362 : vector<8x256xf32> to vector<8x256xbf16>
    %c4_173 = arith.constant 4 : index
    %c0_174 = arith.constant 0 : index
    %c0_175 = arith.constant 0 : index
    %391 = vector.load %arg9[%c4_173, %c0_174, %c0_175] : memref<9x8x8xbf16, #tpu.memory_space<vmem>>, vector<1x8x8xbf16>
    %392 = vector.shape_cast %391 : vector<1x8x8xbf16> to vector<8x8xbf16>
    %cst_176 = arith.constant dense<0.000000e+00> : vector<8x256xf32>
    %393 = tpu.matmul %392, %390, %cst_176 {dimension_numbers = #tpu.dot_dimension_numbers<[1], [0], [0], [1], [0, 0, 1, 1], [], []>} : vector<8x8xbf16>, vector<8x256xbf16>, vector<8x256xf32> -> vector<8x256xf32>
    %394 = arith.addf %389, %393 : vector<8x256xf32>
    %c255_i32 = arith.constant 255 : i32
    %395 = tpu.dynamic_rotate %362 by %c255_i32 dim 1 : vector<8x256xf32>, i32 -> vector<8x256xf32>
    %396 = arith.truncf %395 : vector<8x256xf32> to vector<8x256xbf16>
    %c5_177 = arith.constant 5 : index
    %c0_178 = arith.constant 0 : index
    %c0_179 = arith.constant 0 : index
    %397 = vector.load %arg9[%c5_177, %c0_178, %c0_179] : memref<9x8x8xbf16, #tpu.memory_space<vmem>>, vector<1x8x8xbf16>
    %398 = vector.shape_cast %397 : vector<1x8x8xbf16> to vector<8x8xbf16>
    %cst_180 = arith.constant dense<0.000000e+00> : vector<8x256xf32>
    %399 = tpu.matmul %398, %396, %cst_180 {dimension_numbers = #tpu.dot_dimension_numbers<[1], [0], [0], [1], [0, 0, 1, 1], [], []>} : vector<8x8xbf16>, vector<8x256xbf16>, vector<8x256xf32> -> vector<8x256xf32>
    %400 = arith.addf %394, %399 : vector<8x256xf32>
    %c247_i32 = arith.constant 247 : i32
    %401 = tpu.dynamic_rotate %362 by %c247_i32 dim 1 : vector<8x256xf32>, i32 -> vector<8x256xf32>
    %402 = arith.truncf %401 : vector<8x256xf32> to vector<8x256xbf16>
    %c6_181 = arith.constant 6 : index
    %c0_182 = arith.constant 0 : index
    %c0_183 = arith.constant 0 : index
    %403 = vector.load %arg9[%c6_181, %c0_182, %c0_183] : memref<9x8x8xbf16, #tpu.memory_space<vmem>>, vector<1x8x8xbf16>
    %404 = vector.shape_cast %403 : vector<1x8x8xbf16> to vector<8x8xbf16>
    %cst_184 = arith.constant dense<0.000000e+00> : vector<8x256xf32>
    %405 = tpu.matmul %404, %402, %cst_184 {dimension_numbers = #tpu.dot_dimension_numbers<[1], [0], [0], [1], [0, 0, 1, 1], [], []>} : vector<8x8xbf16>, vector<8x256xbf16>, vector<8x256xf32> -> vector<8x256xf32>
    %406 = arith.addf %400, %405 : vector<8x256xf32>
    %c246_i32 = arith.constant 246 : i32
    %407 = tpu.dynamic_rotate %362 by %c246_i32 dim 1 : vector<8x256xf32>, i32 -> vector<8x256xf32>
    %408 = arith.truncf %407 : vector<8x256xf32> to vector<8x256xbf16>
    %c7_185 = arith.constant 7 : index
    %c0_186 = arith.constant 0 : index
    %c0_187 = arith.constant 0 : index
    %409 = vector.load %arg9[%c7_185, %c0_186, %c0_187] : memref<9x8x8xbf16, #tpu.memory_space<vmem>>, vector<1x8x8xbf16>
    %410 = vector.shape_cast %409 : vector<1x8x8xbf16> to vector<8x8xbf16>
    %cst_188 = arith.constant dense<0.000000e+00> : vector<8x256xf32>
    %411 = tpu.matmul %410, %408, %cst_188 {dimension_numbers = #tpu.dot_dimension_numbers<[1], [0], [0], [1], [0, 0, 1, 1], [], []>} : vector<8x8xbf16>, vector<8x256xbf16>, vector<8x256xf32> -> vector<8x256xf32>
    %412 = arith.addf %406, %411 : vector<8x256xf32>
    %c245_i32 = arith.constant 245 : i32
    %413 = tpu.dynamic_rotate %362 by %c245_i32 dim 1 : vector<8x256xf32>, i32 -> vector<8x256xf32>
    %414 = arith.truncf %413 : vector<8x256xf32> to vector<8x256xbf16>
    %c8_189 = arith.constant 8 : index
    %c0_190 = arith.constant 0 : index
    %c0_191 = arith.constant 0 : index
    %415 = vector.load %arg9[%c8_189, %c0_190, %c0_191] : memref<9x8x8xbf16, #tpu.memory_space<vmem>>, vector<1x8x8xbf16>
    %416 = vector.shape_cast %415 : vector<1x8x8xbf16> to vector<8x8xbf16>
    %cst_192 = arith.constant dense<0.000000e+00> : vector<8x256xf32>
    %417 = tpu.matmul %416, %414, %cst_192 {dimension_numbers = #tpu.dot_dimension_numbers<[1], [0], [0], [1], [0, 0, 1, 1], [], []>} : vector<8x8xbf16>, vector<8x256xbf16>, vector<8x256xf32> -> vector<8x256xf32>
    %418 = arith.addf %412, %417 : vector<8x256xf32>
    %c0_193 = arith.constant 0 : index
    %c0_194 = arith.constant 0 : index
    %419 = vector.load %arg11[%c0_193, %c0_194] : memref<8x1xf32, #tpu.memory_space<vmem>>, vector<8x1xf32>
    %420 = vector.broadcast %419 : vector<8x1xf32> to vector<8x256xf32>
    %421 = arith.addf %418, %420 : vector<8x256xf32>
    %c0_195 = arith.constant 0 : index
    %c0_196 = arith.constant 0 : index
    %422 = vector.load %arg12[%c0_195, %c0_196] : memref<8x256xf32, #tpu.memory_space<vmem>>, vector<8x256xf32>
    tpu.vector_store %arg12[%c0_195, %c0_196], %421 {strides = array<i32>} : memref<8x256xf32, #tpu.memory_space<vmem>>, vector<8x256xf32>,
    return
  }
  func.func @transform_0(%arg0: i32) -> (i32, i32, i32) {
    %c0_i32 = arith.constant 0 : i32
    %c0_i32_0 = arith.constant 0 : i32
    %c0_i32_1 = arith.constant 0 : i32
    %c0_i32_2 = arith.constant 0 : i32
    return %c0_i32, %c0_i32_0, %c0_i32_1 : i32, i32, i32
  }
  func.func @transform_1(%arg0: i32) -> (i32, i32) {
    %c0_i32 = arith.constant 0 : i32
    %c0_i32_0 = arith.constant 0 : i32
    %c0_i32_1 = arith.constant 0 : i32
    return %c0_i32, %c0_i32_0 : i32, i32
  }
  func.func @transform_2(%arg0: i32) -> (i32, i32, i32) {
    %c0_i32 = arith.constant 0 : i32
    %c0_i32_0 = arith.constant 0 : i32
    %c0_i32_1 = arith.constant 0 : i32
    %c0_i32_2 = arith.constant 0 : i32
    return %c0_i32, %c0_i32_0, %c0_i32_1 : i32, i32, i32
  }
  func.func @transform_3(%arg0: i32) -> (i32, i32) {
    %c0_i32 = arith.constant 0 : i32
    %c0_i32_0 = arith.constant 0 : i32
    %c0_i32_1 = arith.constant 0 : i32
    return %c0_i32, %c0_i32_0 : i32, i32
  }
  func.func @transform_4(%arg0: i32) -> (i32, i32) {
    %c0_i32 = arith.constant 0 : i32
    %c0_i32_0 = arith.constant 0 : i32
    %c0_i32_1 = arith.constant 0 : i32
    return %c0_i32, %c0_i32_0 : i32, i32
  }
  func.func @transform_5(%arg0: i32) -> (i32, i32) {
    %c0_i32 = arith.constant 0 : i32
    %c0_i32_0 = arith.constant 0 : i32
    %c0_i32_1 = arith.constant 0 : i32
    return %c0_i32, %c0_i32_0 : i32, i32
  }
  func.func @transform_6(%arg0: i32) -> (i32, i32) {
    %c0_i32 = arith.constant 0 : i32
    %c0_i32_0 = arith.constant 0 : i32
    %c0_i32_1 = arith.constant 0 : i32
    return %c0_i32, %c0_i32_0 : i32, i32
  }
  func.func @transform_7(%arg0: i32) -> (i32, i32) {
    %c0_i32 = arith.constant 0 : i32
    %c0_i32_0 = arith.constant 0 : i32
    %c0_i32_1 = arith.constant 0 : i32
    return %c0_i32, %c0_i32_0 : i32, i32
  }
  func.func @transform_8(%arg0: i32) -> (i32, i32, i32) {
    %c0_i32 = arith.constant 0 : i32
    %c0_i32_0 = arith.constant 0 : i32
    %c0_i32_1 = arith.constant 0 : i32
    %c0_i32_2 = arith.constant 0 : i32
    return %c0_i32, %c0_i32_0, %c0_i32_1 : i32, i32, i32
  }
  func.func @transform_9(%arg0: i32) -> (i32, i32) {
    %c0_i32 = arith.constant 0 : i32
    %c0_i32_0 = arith.constant 0 : i32
    %c0_i32_1 = arith.constant 0 : i32
    return %c0_i32, %c0_i32_0 : i32, i32
  }
  func.func @transform_10(%arg0: i32) -> (i32, i32) {
    %c0_i32 = arith.constant 0 : i32
    %c0_i32_0 = arith.constant 0 : i32
    %c0_i32_1 = arith.constant 0 : i32
    return %c0_i32, %c0_i32_0 : i32, i32
  }
  func.func @transform_11(%arg0: i32) -> (i32, i32) {
    %c0_i32 = arith.constant 0 : i32
    %c0_i32_0 = arith.constant 0 : i32
    %c0_i32_1 = arith.constant 0 : i32
    return %c0_i32, %c0_i32_0 : i32, i32
  }
}

</mosaic_0001>

<llo_original>
// kernel: tpu_custom_call.1
$region0: #{tpu_custom_call.1}
  #allocation0 [shape = 'u32[]', space=smem, size = 0x4, offset = 0x4, fixed_abs, tag = 'smem constant byte address 0x4 - core index']
  #allocation1 [shape = 'u32[72,128]{1,0:T(1,128)}', space=vmem, size = 0x9000, scoped, tag = 'internal scratch']
  %s0 = inlined_call_operand.vmem [shape: f32[4,4,256], index: 0, kind: input, shape index: {}]
  %s1 = inlined_call_operand.vmem [shape: f32[1,256], index: 1, kind: input, shape index: {}]
  %s2 = inlined_call_operand.vmem [shape: bf16[9,8,4], index: 2, kind: input, shape index: {}]
  %s3 = inlined_call_operand.vmem [shape: f32[8,1], index: 3, kind: input, shape index: {}]
  %s4 = inlined_call_operand.vmem [shape: f32[4,1], index: 4, kind: input, shape index: {}]
  %s5 = inlined_call_operand.vmem [shape: f32[4,1], index: 5, kind: input, shape index: {}]
  %s6 = inlined_call_operand.vmem [shape: f32[8,1], index: 6, kind: input, shape index: {}]
  %s7 = inlined_call_operand.vmem [shape: f32[8,1], index: 7, kind: input, shape index: {}]
  %s8 = inlined_call_operand.vmem [shape: bf16[9,8,8], index: 8, kind: input, shape index: {}]
  %s9 = inlined_call_operand.vmem [shape: bf16[8,4], index: 9, kind: input, shape index: {}]
  %s10 = inlined_call_operand.vmem [shape: f32[8,1], index: 10, kind: input, shape index: {}]
  %s11 = inlined_call_operand.hbm [shape: f32[8,256], index: 11, kind: output, shape index: {}]
  %s12 = sld [smem:[#allocation0]]
  $region54: #{tpu_custom_call.1} parent=0
    _
  %s14 = ssub.s32 1, %s12
  %s15 = scalar_select 0, %s14, %s12
  $region1: #{tpu_custom_call.1} parent=0
    #allocation2 [shape = 'u8[8192]{0}', space=vmem, size = 0x2000, scoped, tag = 'output window, operand 0, single buffered']
    #allocation3 [shape = 's32[1]{0}', space=sflag, size = 0x4, scoped, tag = 'scoped memory for tpu_custom_call.1']
    %16 = vsyncpa [#allocation3], 0
    // Predicated region
    $region2: #{tpu_custom_call.1} parent=1 // pred_check
      _
    $region3: #{tpu_custom_call.1} parent=1 // pred_check_branch
      %18 = sbr.rel (0) target = $region5
    $region4: #{tpu_custom_call.1} parent=1 // pred_region
      _
    $region5: #{tpu_custom_call.1} parent=1 // pred_fallthru
      _
    // Predicated region
    $region6: #{tpu_custom_call.1} parent=1 // pred_check
      _
    $region7: #{tpu_custom_call.1} parent=1 // pred_check_branch
      %20 = sbr.rel (0) target = $region9
    $region8: #{tpu_custom_call.1} parent=1 // pred_region
      _
    $region9: #{tpu_custom_call.1} parent=1 // pred_fallthru
      _
    // Predicated region
    $region10: #{tpu_custom_call.1} parent=1 // pred_check
      _
    $region11: #{tpu_custom_call.1} parent=1 // pred_check_branch
      %22 = sbr.rel (0) target = $region13
    $region12: #{tpu_custom_call.1} parent=1 // pred_region
      _
    $region13: #{tpu_custom_call.1} parent=1 // pred_fallthru
      _
    // Predicated region
    $region14: #{tpu_custom_call.1} parent=1 // pred_check
      _
    $region15: #{tpu_custom_call.1} parent=1 // pred_check_branch
      %24 = sbr.rel (0) target = $region17
    $region16: #{tpu_custom_call.1} parent=1 // pred_region
      _
    $region17: #{tpu_custom_call.1} parent=1 // pred_fallthru
      _
    // Predicated region
    $region18: #{tpu_custom_call.1} parent=1 // pred_check
      _
    $region19: #{tpu_custom_call.1} parent=1 // pred_check_branch
      %26 = sbr.rel (0) target = $region21
    $region20: #{tpu_custom_call.1} parent=1 // pred_region
      _
    $region21: #{tpu_custom_call.1} parent=1 // pred_fallthru
      _
    // Predicated region
    $region22: #{tpu_custom_call.1} parent=1 // pred_check
      _
    $region23: #{tpu_custom_call.1} parent=1 // pred_check_branch
      %28 = sbr.rel (0) target = $region25
    $region24: #{tpu_custom_call.1} parent=1 // pred_region
      _
    $region25: #{tpu_custom_call.1} parent=1 // pred_fallthru
      _
    // Predicated region
    $region26: #{tpu_custom_call.1} parent=1 // pred_check
      _
    $region27: #{tpu_custom_call.1} parent=1 // pred_check_branch
      %30 = sbr.rel (0) target = $region29
    $region28: #{tpu_custom_call.1} parent=1 // pred_region
      _
    $region29: #{tpu_custom_call.1} parent=1 // pred_fallthru
      _
    // Predicated region
    $region30: #{tpu_custom_call.1} parent=1 // pred_check
      _
    $region31: #{tpu_custom_call.1} parent=1 // pred_check_branch
      %32 = sbr.rel (0) target = $region33
    $region32: #{tpu_custom_call.1} parent=1 // pred_region
      _
    $region33: #{tpu_custom_call.1} parent=1 // pred_fallthru
      _
    // Predicated region
    $region34: #{tpu_custom_call.1} parent=1 // pred_check
      _
    $region35: #{tpu_custom_call.1} parent=1 // pred_check_branch
      %34 = sbr.rel (0) target = $region37
    $region36: #{tpu_custom_call.1} parent=1 // pred_region
      _
    $region37: #{tpu_custom_call.1} parent=1 // pred_fallthru
      _
    // Predicated region
    $region38: #{tpu_custom_call.1} parent=1 // pred_check
      _
    $region39: #{tpu_custom_call.1} parent=1 // pred_check_branch
      %36 = sbr.rel (0) target = $region41
    $region40: #{tpu_custom_call.1} parent=1 // pred_region
      _
    $region41: #{tpu_custom_call.1} parent=1 // pred_fallthru
      _
    // Predicated region
    $region42: #{tpu_custom_call.1} parent=1 // pred_check
      _
    $region43: #{tpu_custom_call.1} parent=1 // pred_check_branch
      %38 = sbr.rel (0) target = $region45
    $region44: #{tpu_custom_call.1} parent=1 // pred_region
      _
    $region45: #{tpu_custom_call.1} parent=1 // pred_fallthru
      _
    %v40 = vld [vmem:[%s1] sm:$0x3]
    %v41 = vld [vmem:[%s0] sm:$0xff]
    %s42 = scalar_lea.vmem %s0, 8
    %v43 = vld [vmem:[%s42] sm:$0xff]
    %s44 = scalar_lea.vmem %s0, 16
    %v45 = vld [vmem:[%s44] sm:$0xff]
    %s46 = scalar_lea.vmem %s0, 24
    %v47 = vld [vmem:[%s46] sm:$0xff]
    %49 = vst [vmem:[#allocation1] ss:$2 sm:$0xff] %v41
    %v50 = vld.sshfl [vmem:[#allocation1] sm:$0xff pattern:$0x75316420]
    %v51 = vld.sshfl [vmem:[#allocation1 + $0x8] sm:$0xff pattern:$0x75316420]
    %vm54 = vcmask 1043456
    %v55 = vsel %vm54, %v50, 0.0
    %v56 = vsel %vm54, %v51, 0.0
    %v57 = vadd.f32 %v55, %v56
    %58 = vadd.xlane.f32.xlu0 %v57
    %v59 = vpop.xlane.xlu0 %58
    %v60 = vadd.f32 %v59, 0.0
    %v61 = vmul.f32 %v41, %v41
    %63 = vst [vmem:[#allocation1] ss:$2 sm:$0xff] %v61
    %v64 = vld.sshfl [vmem:[#allocation1] sm:$0xff pattern:$0x75316420]
    %v65 = vld.sshfl [vmem:[#allocation1 + $0x8] sm:$0xff pattern:$0x75316420]
    %v68 = vsel %vm54, %v64, 0.0
    %v69 = vsel %vm54, %v65, 0.0
    %v70 = vadd.f32 %v68, %v69
    %71 = vadd.xlane.f32.xlu0 %v70
    %v72 = vpop.xlane.xlu0 %71
    %v73 = vadd.f32 %v72, 0.0
    %75 = vst [vmem:[#allocation1] ss:$2 sm:$0xff] %v43
    %v76 = vld.sshfl [vmem:[#allocation1] sm:$0xff pattern:$0x75316420]
    %v77 = vld.sshfl [vmem:[#allocation1 + $0x8] sm:$0xff pattern:$0x75316420]
    %v80 = vsel %vm54, %v76, 0.0
    %v81 = vsel %vm54, %v77, 0.0
    %v82 = vadd.f32 %v80, %v81
    %83 = vadd.xlane.f32.xlu0 %v82
    %v84 = vpop.xlane.xlu0 %83
    %v85 = vadd.f32 %v60, %v84
    %v86 = vmul.f32 %v43, %v43
    %88 = vst [vmem:[#allocation1] ss:$2 sm:$0xff] %v86
    %v89 = vld.sshfl [vmem:[#allocation1] sm:$0xff pattern:$0x75316420]
    %v90 = vld.sshfl [vmem:[#allocation1 + $0x8] sm:$0xff pattern:$0x75316420]
    %v93 = vsel %vm54, %v89, 0.0
    %v94 = vsel %vm54, %v90, 0.0
    %v95 = vadd.f32 %v93, %v94
    %96 = vadd.xlane.f32.xlu0 %v95
    %v97 = vpop.xlane.xlu0 %96
    %v98 = vadd.f32 %v73, %v97
    %100 = vst [vmem:[#allocation1] ss:$2 sm:$0xff] %v45
    %v101 = vld.sshfl [vmem:[#allocation1] sm:$0xff pattern:$0x75316420]
    %v102 = vld.sshfl [vmem:[#allocation1 + $0x8] sm:$0xff pattern:$0x75316420]
    %v105 = vsel %vm54, %v101, 0.0
    %v106 = vsel %vm54, %v102, 0.0
    %v107 = vadd.f32 %v105, %v106
    %108 = vadd.xlane.f32.xlu0 %v107
    %v109 = vpop.xlane.xlu0 %108
    %v110 = vadd.f32 %v85, %v109
    %v111 = vmul.f32 %v45, %v45
    %113 = vst [vmem:[#allocation1] ss:$2 sm:$0xff] %v111
    %v114 = vld.sshfl [vmem:[#allocation1] sm:$0xff pattern:$0x75316420]
    %v115 = vld.sshfl [vmem:[#allocation1 + $0x8] sm:$0xff pattern:$0x75316420]
    %v118 = vsel %vm54, %v114, 0.0
    %v119 = vsel %vm54, %v115, 0.0
    %v120 = vadd.f32 %v118, %v119
    %121 = vadd.xlane.f32.xlu0 %v120
    %v122 = vpop.xlane.xlu0 %121
    %v123 = vadd.f32 %v98, %v122
    %125 = vst [vmem:[#allocation1] ss:$2 sm:$0xff] %v47
    %v126 = vld.sshfl [vmem:[#allocation1] sm:$0xff pattern:$0x75316420]
    %v127 = vld.sshfl [vmem:[#allocation1 + $0x8] sm:$0xff pattern:$0x75316420]
    %v130 = vsel %vm54, %v126, 0.0
    %v131 = vsel %vm54, %v127, 0.0
    %v132 = vadd.f32 %v130, %v131
    %133 = vadd.xlane.f32.xlu0 %v132
    %v134 = vpop.xlane.xlu0 %133
    %v135 = vadd.f32 %v110, %v134
    %v136 = vmul.f32 %v47, %v47
    %138 = vst [vmem:[#allocation1] ss:$2 sm:$0xff] %v136
    %v139 = vld.sshfl [vmem:[#allocation1] sm:$0xff pattern:$0x75316420]
    %v140 = vld.sshfl [vmem:[#allocation1 + $0x8] sm:$0xff pattern:$0x75316420]
    %v143 = vsel %vm54, %v139, 0.0
    %v144 = vsel %vm54, %v140, 0.0
    %v145 = vadd.f32 %v143, %v144
    %146 = vadd.xlane.f32.xlu0 %v145
    %v147 = vpop.xlane.xlu0 %146
    %v148 = vadd.f32 %v123, %v147
    %v149 = vmul.f32 %v135, 0.001953125
    %v150 = vmul.f32 %v148, 0.001953125
    %v151 = vmul.f32 %v149, %v149
    %v152 = vsub.f32 %v150, %v151
    %v153 = vld [vmem:[%s4] sm:$0xf]
    %v154 = vadd.f32 %v152, 1e-05
    %v155 = vrsqrt.pop %v154
    %v156 = vmul.f32 %v155, %v154
    %v157 = vmul.f32 %v156, %v155
    %v158 = vmul.f32 0.5, %v157
    %v159 = vsub.f32 1.5, %v158
    %v160 = vmul.f32 %v155, %v159
    %vm161 = vweird.f32 %v154
    %vm162 = vweird.f32 %v155
    %vm163 = vmor %vm161, %vm162
    %v164 = vsel %vm163, %v155, %v160
    %v165 = vmul.f32 %v153, %v164
    %v166 = vld [vmem:[%s5] sm:$0xf]
    %v167 = vmul.f32 %v149, %v165
    %v168 = vsub.f32 %v166, %v167
    %170 = vset.pattern.permute.xlu0 0
    %171 = vperm.xlu0 %170, %v165
    %v172 = vpop.permute.xlu0 %171
    %v174 = vunpack.c.l.s4 839922192
    %v175 = vunpack.c.0.s8 %v174
    %v176 = vperm.slane %v172, %v175
    %v178 = vmul.f32 %v41, %v176
    %180 = vset.pattern.permute.xlu0 0
    %181 = vperm.xlu0 %180, %v168
    %v182 = vpop.permute.xlu0 %181
    %v184 = vunpack.c.l.s4 839922192
    %v185 = vunpack.c.0.s8 %v184
    %v186 = vperm.slane %v182, %v185
    %v188 = vadd.f32 %v178, %v186
    %v189 = vmul.f32 %v188, 0.5
    %v190 = vmul.f32 %v188, 0.70710677
    %vm191 = vcmp.ge.f32.partialorder %v190, 0.0
    %v192 = vsel %vm191, 1.0, -1.0
    %v193 = vand.u32 2147483647, %v190
    %v194 = vmul.f32 %v193, 0.3275911
    %v195 = vadd.f32 %v194, 1.0
    %v196 = vrcp.pop %v195
    %v197 = vmul.f32 %v195, %v196
    %v198 = vsub.f32 1.0, %v197
    %v199 = vmul.f32 %v196, %v198
    %v200 = vadd.f32 %v196, %v199
    %vm201 = vweird.f32 %v195
    %vm202 = vweird.f32 %v196
    %vm203 = vmor %vm201, %vm202
    %v204 = vsel %vm203, %v196, %v200
    %v205 = vand.u32 2147483647, %v195
    %vm206 = vcmp.eq.f32.partialorder %v205, 8.507059e+37
    %v207 = vand.u32 %v195, 2147483648
    %v208 = vor.u32 1.1754944e-38, %v207
    %v209 = vsel %vm206, %v208, %v204
    %v210 = vmul.f32 1.0, %v209
    %v211 = vmul.f32 %v210, 1.0614054
    %v212 = vadd.f32 %v211, -1.4531521
    %v213 = vmul.f32 %v210, %v212
    %v214 = vadd.f32 %v213, 1.4214138
    %v215 = vmul.f32 %v210, %v214
    %v216 = vadd.f32 %v215, -0.28449672
    %v217 = vmul.f32 %v210, %v216
    %v218 = vadd.f32 %v217, 0.2548296
    %v219 = vmul.f32 %v210, %v218
    %v220 = vsub.f32 0.0, %v193
    %v221 = vmul.f32 %v220, %v193
    %v222 = vmul.f32 %v221, 1.442695
    %v223 = vpow.pop %v222
    %v224 = vmul.f32 %v219, %v223
    %v225 = vsub.f32 1.0, %v224
    %v226 = vmul.f32 %v192, %v225
    %v227 = vadd.f32 %v226, 1.0
    %v228 = vmul.f32 %v189, %v227
    %v230 = vperm.slane %v40, 0
    %v231 = vperm.slane %v40, 1
    %v232 = vrot.slane %v231, 4
    %v233 = vsel %vm54, %v230, %v232
    %v235 = vmul.f32 %v228, %v233
    %v236 = vmul.f32 %v43, %v176
    %v237 = vadd.f32 %v236, %v186
    %v238 = vmul.f32 %v237, 0.5
    %v239 = vmul.f32 %v237, 0.70710677
    %vm240 = vcmp.ge.f32.partialorder %v239, 0.0
    %v241 = vsel %vm240, 1.0, -1.0
    %v242 = vand.u32 2147483647, %v239
    %v243 = vmul.f32 %v242, 0.3275911
    %v244 = vadd.f32 %v243, 1.0
    %v245 = vrcp.pop %v244
    %v246 = vmul.f32 %v244, %v245
    %v247 = vsub.f32 1.0, %v246
    %v248 = vmul.f32 %v245, %v247
    %v249 = vadd.f32 %v245, %v248
    %vm250 = vweird.f32 %v244
    %vm251 = vweird.f32 %v245
    %vm252 = vmor %vm250, %vm251
    %v253 = vsel %vm252, %v245, %v249
    %v254 = vand.u32 2147483647, %v244
    %vm255 = vcmp.eq.f32.partialorder %v254, 8.507059e+37
    %v256 = vand.u32 %v244, 2147483648
    %v257 = vor.u32 1.1754944e-38, %v256
    %v258 = vsel %vm255, %v257, %v253
    %v259 = vmul.f32 1.0, %v258
    %v260 = vmul.f32 %v259, 1.0614054
    %v261 = vadd.f32 %v260, -1.4531521
    %v262 = vmul.f32 %v259, %v261
    %v263 = vadd.f32 %v262, 1.4214138
    %v264 = vmul.f32 %v259, %v263
    %v265 = vadd.f32 %v264, -0.28449672
    %v266 = vmul.f32 %v259, %v265
    %v267 = vadd.f32 %v266, 0.2548296
    %v268 = vmul.f32 %v259, %v267
    %v269 = vsub.f32 0.0, %v242
    %v270 = vmul.f32 %v269, %v242
    %v271 = vmul.f32 %v270, 1.442695
    %v272 = vpow.pop %v271
    %v273 = vmul.f32 %v268, %v272
    %v274 = vsub.f32 1.0, %v273
    %v275 = vmul.f32 %v241, %v274
    %v276 = vadd.f32 %v275, 1.0
    %v277 = vmul.f32 %v238, %v276
    %v278 = vmul.f32 %v277, %v233
    %v279 = vmul.f32 %v45, %v176
    %v280 = vadd.f32 %v279, %v186
    %v281 = vmul.f32 %v280, 0.5
    %v282 = vmul.f32 %v280, 0.70710677
    %vm283 = vcmp.ge.f32.partialorder %v282, 0.0
    %v284 = vsel %vm283, 1.0, -1.0
    %v285 = vand.u32 2147483647, %v282
    %v286 = vmul.f32 %v285, 0.3275911
    %v287 = vadd.f32 %v286, 1.0
    %v288 = vrcp.pop %v287
    %v289 = vmul.f32 %v287, %v288
    %v290 = vsub.f32 1.0, %v289
    %v291 = vmul.f32 %v288, %v290
    %v292 = vadd.f32 %v288, %v291
    %vm293 = vweird.f32 %v287
    %vm294 = vweird.f32 %v288
    %vm295 = vmor %vm293, %vm294
    %v296 = vsel %vm295, %v288, %v292
    %v297 = vand.u32 2147483647, %v287
    %vm298 = vcmp.eq.f32.partialorder %v297, 8.507059e+37
    %v299 = vand.u32 %v287, 2147483648
    %v300 = vor.u32 1.1754944e-38, %v299
    %v301 = vsel %vm298, %v300, %v296
    %v302 = vmul.f32 1.0, %v301
    %v303 = vmul.f32 %v302, 1.0614054
    %v304 = vadd.f32 %v303, -1.4531521
    %v305 = vmul.f32 %v302, %v304
    %v306 = vadd.f32 %v305, 1.4214138
    %v307 = vmul.f32 %v302, %v306
    %v308 = vadd.f32 %v307, -0.28449672
    %v309 = vmul.f32 %v302, %v308
    %v310 = vadd.f32 %v309, 0.2548296
    %v311 = vmul.f32 %v302, %v310
    %v312 = vsub.f32 0.0, %v285
    %v313 = vmul.f32 %v312, %v285
    %v314 = vmul.f32 %v313, 1.442695
    %v315 = vpow.pop %v314
    %v316 = vmul.f32 %v311, %v315
    %v317 = vsub.f32 1.0, %v316
    %v318 = vmul.f32 %v284, %v317
    %v319 = vadd.f32 %v318, 1.0
    %v320 = vmul.f32 %v281, %v319
    %v321 = vmul.f32 %v320, %v233
    %v322 = vmul.f32 %v47, %v176
    %v323 = vadd.f32 %v322, %v186
    %v324 = vmul.f32 %v323, 0.5
    %v325 = vmul.f32 %v323, 0.70710677
    %vm326 = vcmp.ge.f32.partialorder %v325, 0.0
    %v327 = vsel %vm326, 1.0, -1.0
    %v328 = vand.u32 2147483647, %v325
    %v329 = vmul.f32 %v328, 0.3275911
    %v330 = vadd.f32 %v329, 1.0
    %v331 = vrcp.pop %v330
    %v332 = vmul.f32 %v330, %v331
    %v333 = vsub.f32 1.0, %v332
    %v334 = vmul.f32 %v331, %v333
    %v335 = vadd.f32 %v331, %v334
    %vm336 = vweird.f32 %v330
    %vm337 = vweird.f32 %v331
    %vm338 = vmor %vm336, %vm337
    %v339 = vsel %vm338, %v331, %v335
    %v340 = vand.u32 2147483647, %v330
    %vm341 = vcmp.eq.f32.partialorder %v340, 8.507059e+37
    %v342 = vand.u32 %v330, 2147483648
    %v343 = vor.u32 1.1754944e-38, %v342
    %v344 = vsel %vm341, %v343, %v339
    %v345 = vmul.f32 1.0, %v344
    %v346 = vmul.f32 %v345, 1.0614054
    %v347 = vadd.f32 %v346, -1.4531521
    %v348 = vmul.f32 %v345, %v347
    %v349 = vadd.f32 %v348, 1.4214138
    %v350 = vmul.f32 %v345, %v349
    %v351 = vadd.f32 %v350, -0.28449672
    %v352 = vmul.f32 %v345, %v351
    %v353 = vadd.f32 %v352, 0.2548296
    %v354 = vmul.f32 %v345, %v353
    %v355 = vsub.f32 0.0, %v328
    %v356 = vmul.f32 %v355, %v328
    %v357 = vmul.f32 %v356, 1.442695
    %v358 = vpow.pop %v357
    %v359 = vmul.f32 %v354, %v358
    %v360 = vsub.f32 1.0, %v359
    %v361 = vmul.f32 %v327, %v360
    %v362 = vadd.f32 %v361, 1.0
    %v363 = vmul.f32 %v324, %v362
    %v364 = vmul.f32 %v363, %v233
    %366 = vst [vmem:[#allocation1] ss:$2 sm:$0xff] %v364
    %v367 = vld.sshfl [vmem:[#allocation1] sm:$0xff pattern:$0x75316420]
    %v368 = vld.sshfl [vmem:[#allocation1 + $0x8] sm:$0xff pattern:$0x75316420]
    %371 = vrot.lane.b32.xlu0 %v367, 11
    %v372 = vpop.permute.xlu0 %371
    %373 = vrot.lane.b32.xlu0 %v368, 11
    %v374 = vpop.permute.xlu0 %373
    %v375 = vlaneseq
    %v376 = vand.u32 %v375, 127
    %vm377 = vcmp.lt.s32.totalorder %v376, 11
    %v378 = vsel %vm377, %v372, %v374
    %v379 = vsel %vm377, %v374, %v372
    %v380 = vpack.c.bf16 %v379, %v379
    %v381 = vpack.c.bf16 %v378, %v378
    %v382 = vld [vmem:[%s2] sm:$0xf]
    %384 = vst [vmem:[#allocation1] ss:$2 sm:$0xff] %v321
    %v385 = vld.sshfl [vmem:[#allocation1] sm:$0xff pattern:$0x75316420]
    %v386 = vld.sshfl [vmem:[#allocation1 + $0x8] sm:$0xff pattern:$0x75316420]
    %389 = vrot.lane.b32.xlu0 %v385, 10
    %v390 = vpop.permute.xlu0 %389
    %391 = vrot.lane.b32.xlu0 %v386, 10
    %v392 = vpop.permute.xlu0 %391
    %vm393 = vcmp.lt.s32.totalorder %v376, 10
    %v394 = vsel %vm393, %v390, %v392
    %v395 = vsel %vm393, %v392, %v390
    %v396 = vpack.c.bf16 %v395, %v395
    %v397 = vpack.c.bf16 %v394, %v394
    %s398 = scalar_lea.vmem %s2, 4
    %v399 = vld [vmem:[%s398] sm:$0xf]
    %vm400 = vcmask 31744
    %v402 = vsel %vm400, %v399, 0
    %vm404 = vcmask 1041408
    %v406 = vsel %vm404, %v396, 0
    %v409 = vsel %vm404, %v397, 0
    %411 = vmatpush.bf16.msra.mxu0 0
    %412 = vmatpush.bf16.msra.mxu0 0
    %413 = vmatpush.bf16.msra.mxu0 0
    %414 = vmatpush.bf16.msra.mxu0 0
    %415 = vmatpush.bf16.msra.mxu0 0
    %416 = vmatpush.bf16.msra.mxu0 0
    %417 = vmatpush.bf16.msra.mxu0 0
    %418 = vmatpush.bf16.msra.mxu0 %v406
    %419 = vmatmul.bf16.gmra.mxu0 %v402
    %v420 = vpop.f32.mrf.mxu0
    %v421 = vadd.f32 0.0, %v420
    %v422 = vpop.f32.mrf.mxu0
    %423 = vdwg.mxu0
    %424 = vmatpush.bf16.msra.mxu0 0
    %425 = vmatpush.bf16.msra.mxu0 0
    %426 = vmatpush.bf16.msra.mxu0 0
    %427 = vmatpush.bf16.msra.mxu0 0
    %428 = vmatpush.bf16.msra.mxu0 0
    %429 = vmatpush.bf16.msra.mxu0 0
    %430 = vmatpush.bf16.msra.mxu0 0
    %431 = vmatpush.bf16.msra.mxu0 %v409
    %432 = vmatmul.bf16.gmra.mxu0 %v402
    %v433 = vpop.f32.mrf.mxu0
    %v434 = vadd.f32 0.0, %v433
    %v435 = vpop.f32.mrf.mxu0
    %436 = vdwg.mxu0
    %v438 = vsel %vm400, %v382, 0
    %v441 = vsel %vm404, %v380, 0
    %v444 = vsel %vm404, %v381, 0
    %446 = vmatpush.bf16.msra.mxu0 0
    %447 = vmatpush.bf16.msra.mxu0 0
    %448 = vmatpush.bf16.msra.mxu0 0
    %449 = vmatpush.bf16.msra.mxu0 0
    %450 = vmatpush.bf16.msra.mxu0 0
    %451 = vmatpush.bf16.msra.mxu0 0
    %452 = vmatpush.bf16.msra.mxu0 0
    %453 = vmatpush.bf16.msra.mxu0 %v441
    %454 = vmatmul.bf16.gmra.mxu0 %v438
    %v455 = vpop.f32.mrf.mxu0
    %v456 = vadd.f32 %v421, %v455
    %v457 = vpop.f32.mrf.mxu0
    %458 = vdwg.mxu0
    %459 = vmatpush.bf16.msra.mxu0 0
    %460 = vmatpush.bf16.msra.mxu0 0
    %461 = vmatpush.bf16.msra.mxu0 0
    %462 = vmatpush.bf16.msra.mxu0 0
    %463 = vmatpush.bf16.msra.mxu0 0
    %464 = vmatpush.bf16.msra.mxu0 0
    %465 = vmatpush.bf16.msra.mxu0 0
    %466 = vmatpush.bf16.msra.mxu0 %v444
    %467 = vmatmul.bf16.gmra.mxu0 %v438
    %v468 = vpop.f32.mrf.mxu0
    %v469 = vadd.f32 %v434, %v468
    %v470 = vpop.f32.mrf.mxu0
    %471 = vdwg.mxu0
    %472 = vst [vmem:[#allocation1] ss:$2 sm:$0xff] %v364
    %v473 = vld.sshfl [vmem:[#allocation1] sm:$0xff pattern:$0x75316420]
    %v474 = vld.sshfl [vmem:[#allocation1 + $0x8] sm:$0xff pattern:$0x75316420]
    %477 = vrot.lane.b32.xlu0 %v473, 10
    %v478 = vpop.permute.xlu0 %477
    %479 = vrot.lane.b32.xlu0 %v474, 10
    %v480 = vpop.permute.xlu0 %479
    %v481 = vsel %vm393, %v478, %v480
    %v482 = vsel %vm393, %v480, %v478
    %v483 = vpack.c.bf16 %v482, %v482
    %v484 = vpack.c.bf16 %v481, %v481
    %s485 = scalar_lea.vmem %s2, 8
    %v486 = vld [vmem:[%s485] sm:$0xf]
    %v488 = vsel %vm400, %v486, 0
    %v491 = vsel %vm404, %v483, 0
    %v494 = vsel %vm404, %v484, 0
    %496 = vmatpush.bf16.msra.mxu0 0
    %497 = vmatpush.bf16.msra.mxu0 0
    %498 = vmatpush.bf16.msra.mxu0 0
    %499 = vmatpush.bf16.msra.mxu0 0
    %500 = vmatpush.bf16.msra.mxu0 0
    %501 = vmatpush.bf16.msra.mxu0 0
    %502 = vmatpush.bf16.msra.mxu0 0
    %503 = vmatpush.bf16.msra.mxu0 %v491
    %504 = vmatmul.bf16.gmra.mxu0 %v488
    %v505 = vpop.f32.mrf.mxu0
    %v506 = vadd.f32 0.0, %v505
    %v507 = vpop.f32.mrf.mxu0
    %508 = vdwg.mxu0
    %509 = vmatpush.bf16.msra.mxu0 0
    %510 = vmatpush.bf16.msra.mxu0 0
    %511 = vmatpush.bf16.msra.mxu0 0
    %512 = vmatpush.bf16.msra.mxu0 0
    %513 = vmatpush.bf16.msra.mxu0 0
    %514 = vmatpush.bf16.msra.mxu0 0
    %515 = vmatpush.bf16.msra.mxu0 0
    %516 = vmatpush.bf16.msra.mxu0 %v494
    %517 = vmatmul.bf16.gmra.mxu0 %v488
    %v518 = vpop.f32.mrf.mxu0
    %v519 = vadd.f32 0.0, %v518
    %v520 = vpop.f32.mrf.mxu0
    %521 = vdwg.mxu0
    %v522 = vadd.f32 %v456, %v506
    %v523 = vadd.f32 %v469, %v519
    %525 = vst [vmem:[#allocation1] ss:$2 sm:$0xff] %v278
    %v526 = vld.sshfl [vmem:[#allocation1] sm:$0xff pattern:$0x75316420]
    %v527 = vld.sshfl [vmem:[#allocation1 + $0x8] sm:$0xff pattern:$0x75316420]
    %530 = vrot.lane.b32.xlu0 %v526, 1
    %v531 = vpop.permute.xlu0 %530
    %532 = vrot.lane.b32.xlu0 %v527, 1
    %v533 = vpop.permute.xlu0 %532
    %vm534 = vcmp.lt.s32.totalorder %v376, 1
    %v535 = vsel %vm534, %v531, %v533
    %v536 = vsel %vm534, %v533, %v531
    %v537 = vpack.c.bf16 %v536, %v536
    %v538 = vpack.c.bf16 %v535, %v535
    %s539 = scalar_lea.vmem %s2, 12
    %v540 = vld [vmem:[%s539] sm:$0xf]
    %v542 = vsel %vm400, %v540, 0
    %v545 = vsel %vm404, %v537, 0
    %v548 = vsel %vm404, %v538, 0
    %550 = vmatpush.bf16.msra.mxu0 0
    %551 = vmatpush.bf16.msra.mxu0 0
    %552 = vmatpush.bf16.msra.mxu0 0
    %553 = vmatpush.bf16.msra.mxu0 0
    %554 = vmatpush.bf16.msra.mxu0 0
    %555 = vmatpush.bf16.msra.mxu0 0
    %556 = vmatpush.bf16.msra.mxu0 0
    %557 = vmatpush.bf16.msra.mxu0 %v545
    %558 = vmatmul.bf16.gmra.mxu0 %v542
    %v559 = vpop.f32.mrf.mxu0
    %v560 = vadd.f32 0.0, %v559
    %v561 = vpop.f32.mrf.mxu0
    %562 = vdwg.mxu0
    %563 = vmatpush.bf16.msra.mxu0 0
    %564 = vmatpush.bf16.msra.mxu0 0
    %565 = vmatpush.bf16.msra.mxu0 0
    %566 = vmatpush.bf16.msra.mxu0 0
    %567 = vmatpush.bf16.msra.mxu0 0
    %568 = vmatpush.bf16.msra.mxu0 0
    %569 = vmatpush.bf16.msra.mxu0 0
    %570 = vmatpush.bf16.msra.mxu0 %v548
    %571 = vmatmul.bf16.gmra.mxu0 %v542
    %v572 = vpop.f32.mrf.mxu0
    %v573 = vadd.f32 0.0, %v572
    %v574 = vpop.f32.mrf.mxu0
    %575 = vdwg.mxu0
    %v576 = vadd.f32 %v522, %v560
    %v577 = vadd.f32 %v523, %v573
    %579 = vst [vmem:[#allocation1] ss:$2 sm:$0xff] %v235
    %v580 = vld.sshfl [vmem:[#allocation1] sm:$0xff pattern:$0x75316420]
    %v581 = vld.sshfl [vmem:[#allocation1 + $0x8] sm:$0xff pattern:$0x75316420]
    %v584 = vpack.c.bf16 %v580, %v580
    %v585 = vpack.c.bf16 %v581, %v581
    %s586 = scalar_lea.vmem %s2, 16
    %v587 = vld [vmem:[%s586] sm:$0xf]
    %v589 = vsel %vm400, %v587, 0
    %v592 = vsel %vm404, %v584, 0
    %v595 = vsel %vm404, %v585, 0
    %597 = vmatpush.bf16.msra.mxu0 0
    %598 = vmatpush.bf16.msra.mxu0 0
    %599 = vmatpush.bf16.msra.mxu0 0
    %600 = vmatpush.bf16.msra.mxu0 0
    %601 = vmatpush.bf16.msra.mxu0 0
    %602 = vmatpush.bf16.msra.mxu0 0
    %603 = vmatpush.bf16.msra.mxu0 0
    %604 = vmatpush.bf16.msra.mxu0 %v592
    %605 = vmatmul.bf16.gmra.mxu0 %v589
    %v606 = vpop.f32.mrf.mxu0
    %v607 = vadd.f32 0.0, %v606
    %v608 = vpop.f32.mrf.mxu0
    %609 = vdwg.mxu0
    %610 = vmatpush.bf16.msra.mxu0 0
    %611 = vmatpush.bf16.msra.mxu0 0
    %612 = vmatpush.bf16.msra.mxu0 0
    %613 = vmatpush.bf16.msra.mxu0 0
    %614 = vmatpush.bf16.msra.mxu0 0
    %615 = vmatpush.bf16.msra.mxu0 0
    %616 = vmatpush.bf16.msra.mxu0 0
    %617 = vmatpush.bf16.msra.mxu0 %v595
    %618 = vmatmul.bf16.gmra.mxu0 %v589
    %v619 = vpop.f32.mrf.mxu0
    %v620 = vadd.f32 0.0, %v619
    %v621 = vpop.f32.mrf.mxu0
    %622 = vdwg.mxu0
    %v623 = vadd.f32 %v576, %v607
    %v624 = vadd.f32 %v577, %v620
    %625 = vst [vmem:[#allocation1] ss:$2 sm:$0xff] %v278
    %v626 = vld.sshfl [vmem:[#allocation1] sm:$0xff pattern:$0x75316420]
    %v627 = vld.sshfl [vmem:[#allocation1 + $0x8] sm:$0xff pattern:$0x75316420]
    %v630 = vpack.c.bf16 %v626, %v626
    %v631 = vpack.c.bf16 %v627, %v627
    %s632 = scalar_lea.vmem %s2, 20
    %v633 = vld [vmem:[%s632] sm:$0xf]
    %v635 = vsel %vm400, %v633, 0
    %v638 = vsel %vm404, %v630, 0
    %v641 = vsel %vm404, %v631, 0
    %643 = vmatpush.bf16.msra.mxu0 0
    %644 = vmatpush.bf16.msra.mxu0 0
    %645 = vmatpush.bf16.msra.mxu0 0
    %646 = vmatpush.bf16.msra.mxu0 0
    %647 = vmatpush.bf16.msra.mxu0 0
    %648 = vmatpush.bf16.msra.mxu0 0
    %649 = vmatpush.bf16.msra.mxu0 0
    %650 = vmatpush.bf16.msra.mxu0 %v638
    %651 = vmatmul.bf16.gmra.mxu0 %v635
    %v652 = vpop.f32.mrf.mxu0
    %v653 = vadd.f32 0.0, %v652
    %v654 = vpop.f32.mrf.mxu0
    %655 = vdwg.mxu0
    %656 = vmatpush.bf16.msra.mxu0 0
    %657 = vmatpush.bf16.msra.mxu0 0
    %658 = vmatpush.bf16.msra.mxu0 0
    %659 = vmatpush.bf16.msra.mxu0 0
    %660 = vmatpush.bf16.msra.mxu0 0
    %661 = vmatpush.bf16.msra.mxu0 0
    %662 = vmatpush.bf16.msra.mxu0 0
    %663 = vmatpush.bf16.msra.mxu0 %v641
    %664 = vmatmul.bf16.gmra.mxu0 %v635
    %v665 = vpop.f32.mrf.mxu0
    %v666 = vadd.f32 0.0, %v665
    %v667 = vpop.f32.mrf.mxu0
    %668 = vdwg.mxu0
    %v669 = vadd.f32 %v623, %v653
    %v670 = vadd.f32 %v624, %v666
    %671 = vst [vmem:[#allocation1] ss:$2 sm:$0xff] %v364
    %v672 = vld.sshfl [vmem:[#allocation1] sm:$0xff pattern:$0x75316420]
    %v673 = vld.sshfl [vmem:[#allocation1 + $0x8] sm:$0xff pattern:$0x75316420]
    %676 = vrot.lane.b32.xlu0 %v672, 1
    %v677 = vpop.permute.xlu0 %676
    %678 = vrot.lane.b32.xlu0 %v673, 1
    %v679 = vpop.permute.xlu0 %678
    %v680 = vsel %vm534, %v677, %v679
    %v681 = vsel %vm534, %v679, %v677
    %v682 = vpack.c.bf16 %v681, %v681
    %v683 = vpack.c.bf16 %v680, %v680
    %s684 = scalar_lea.vmem %s2, 24
    %v685 = vld [vmem:[%s684] sm:$0xf]
    %v687 = vsel %vm400, %v685, 0
    %v690 = vsel %vm404, %v682, 0
    %v693 = vsel %vm404, %v683, 0
    %695 = vmatpush.bf16.msra.mxu0 0
    %696 = vmatpush.bf16.msra.mxu0 0
    %697 = vmatpush.bf16.msra.mxu0 0
    %698 = vmatpush.bf16.msra.mxu0 0
    %699 = vmatpush.bf16.msra.mxu0 0
    %700 = vmatpush.bf16.msra.mxu0 0
    %701 = vmatpush.bf16.msra.mxu0 0
    %702 = vmatpush.bf16.msra.mxu0 %v690
    %703 = vmatmul.bf16.gmra.mxu0 %v687
    %v704 = vpop.f32.mrf.mxu0
    %v705 = vadd.f32 0.0, %v704
    %v706 = vpop.f32.mrf.mxu0
    %707 = vdwg.mxu0
    %708 = vmatpush.bf16.msra.mxu0 0
    %709 = vmatpush.bf16.msra.mxu0 0
    %710 = vmatpush.bf16.msra.mxu0 0
    %711 = vmatpush.bf16.msra.mxu0 0
    %712 = vmatpush.bf16.msra.mxu0 0
    %713 = vmatpush.bf16.msra.mxu0 0
    %714 = vmatpush.bf16.msra.mxu0 0
    %715 = vmatpush.bf16.msra.mxu0 %v693
    %716 = vmatmul.bf16.gmra.mxu0 %v687
    %v717 = vpop.f32.mrf.mxu0
    %v718 = vadd.f32 0.0, %v717
    %v719 = vpop.f32.mrf.mxu0
    %720 = vdwg.mxu0
    %v721 = vadd.f32 %v669, %v705
    %v722 = vadd.f32 %v670, %v718
    %723 = vst [vmem:[#allocation1] ss:$2 sm:$0xff] %v321
    %v724 = vld.sshfl [vmem:[#allocation1] sm:$0xff pattern:$0x75316420]
    %v725 = vld.sshfl [vmem:[#allocation1 + $0x8] sm:$0xff pattern:$0x75316420]
    %v728 = vpack.c.bf16 %v724, %v724
    %v729 = vpack.c.bf16 %v725, %v725
    %s730 = scalar_lea.vmem %s2, 28
    %v731 = vld [vmem:[%s730] sm:$0xf]
    %v733 = vsel %vm400, %v731, 0
    %v736 = vsel %vm404, %v728, 0
    %v739 = vsel %vm404, %v729, 0
    %741 = vmatpush.bf16.msra.mxu0 0
    %742 = vmatpush.bf16.msra.mxu0 0
    %743 = vmatpush.bf16.msra.mxu0 0
    %744 = vmatpush.bf16.msra.mxu0 0
    %745 = vmatpush.bf16.msra.mxu0 0
    %746 = vmatpush.bf16.msra.mxu0 0
    %747 = vmatpush.bf16.msra.mxu0 0
    %748 = vmatpush.bf16.msra.mxu0 %v736
    %749 = vmatmul.bf16.gmra.mxu0 %v733
    %v750 = vpop.f32.mrf.mxu0
    %v751 = vadd.f32 0.0, %v750
    %v752 = vpop.f32.mrf.mxu0
    %753 = vdwg.mxu0
    %754 = vmatpush.bf16.msra.mxu0 0
    %755 = vmatpush.bf16.msra.mxu0 0
    %756 = vmatpush.bf16.msra.mxu0 0
    %757 = vmatpush.bf16.msra.mxu0 0
    %758 = vmatpush.bf16.msra.mxu0 0
    %759 = vmatpush.bf16.msra.mxu0 0
    %760 = vmatpush.bf16.msra.mxu0 0
    %761 = vmatpush.bf16.msra.mxu0 %v739
    %762 = vmatmul.bf16.gmra.mxu0 %v733
    %v763 = vpop.f32.mrf.mxu0
    %v764 = vadd.f32 0.0, %v763
    %v765 = vpop.f32.mrf.mxu0
    %766 = vdwg.mxu0
    %v767 = vadd.f32 %v721, %v751
    %v768 = vadd.f32 %v722, %v764
    %769 = vst [vmem:[#allocation1] ss:$2 sm:$0xff] %v364
    %v770 = vld.sshfl [vmem:[#allocation1] sm:$0xff pattern:$0x75316420]
    %v771 = vld.sshfl [vmem:[#allocation1 + $0x8] sm:$0xff pattern:$0x75316420]
    %v774 = vpack.c.bf16 %v770, %v770
    %v775 = vpack.c.bf16 %v771, %v771
    %s776 = scalar_lea.vmem %s2, 32
    %v777 = vld [vmem:[%s776] sm:$0xf]
    %v779 = vsel %vm400, %v777, 0
    %v782 = vsel %vm404, %v774, 0
    %v785 = vsel %vm404, %v775, 0
    %787 = vmatpush.bf16.msra.mxu0 0
    %788 = vmatpush.bf16.msra.mxu0 0
    %789 = vmatpush.bf16.msra.mxu0 0
    %790 = vmatpush.bf16.msra.mxu0 0
    %791 = vmatpush.bf16.msra.mxu0 0
    %792 = vmatpush.bf16.msra.mxu0 0
    %793 = vmatpush.bf16.msra.mxu0 0
    %794 = vmatpush.bf16.msra.mxu0 %v782
    %795 = vmatmul.bf16.gmra.mxu0 %v779
    %v796 = vpop.f32.mrf.mxu0
    %v797 = vadd.f32 0.0, %v796
    %v798 = vpop.f32.mrf.mxu0
    %799 = vdwg.mxu0
    %800 = vmatpush.bf16.msra.mxu0 0
    %801 = vmatpush.bf16.msra.mxu0 0
    %802 = vmatpush.bf16.msra.mxu0 0
    %803 = vmatpush.bf16.msra.mxu0 0
    %804 = vmatpush.bf16.msra.mxu0 0
    %805 = vmatpush.bf16.msra.mxu0 0
    %806 = vmatpush.bf16.msra.mxu0 0
    %807 = vmatpush.bf16.msra.mxu0 %v785
    %808 = vmatmul.bf16.gmra.mxu0 %v779
    %v809 = vpop.f32.mrf.mxu0
    %v810 = vadd.f32 0.0, %v809
    %v811 = vpop.f32.mrf.mxu0
    %812 = vdwg.mxu0
    %v813 = vadd.f32 %v767, %v797
    %v814 = vadd.f32 %v768, %v810
    %v815 = vld [vmem:[%s3] sm:$0xff]
    %817 = vset.pattern.permute.xlu0 0
    %818 = vperm.xlu0 %817, %v815
    %v819 = vpop.permute.xlu0 %818
    %v821 = vadd.f32 %v813, %v819
    %v822 = vadd.f32 %v814, %v819
    %v825 = vmul.f32 %v821, %v230
    %v826 = vmul.f32 %v822, %v231
    %v827 = vadd.f32 %v825, %v826
    %828 = vadd.xlane.f32.xlu0 %v827
    %v829 = vpop.xlane.xlu0 %828
    %v830 = vmul.f32 %v829, 0.0078125
    %v831 = vsub.f32 %v821, %v830
    %v832 = vsub.f32 %v822, %v830
    %v833 = vmul.f32 %v831, %v831
    %v834 = vmul.f32 %v832, %v832
    %v835 = vmul.f32 %v833, %v230
    %v836 = vmul.f32 %v834, %v231
    %v837 = vadd.f32 %v835, %v836
    %838 = vadd.xlane.f32.xlu0 %v837
    %v839 = vpop.xlane.xlu0 %838
    %v840 = vmul.f32 %v839, 0.0078125
    %v841 = vld [vmem:[%s6] sm:$0xff]
    %v842 = vadd.f32 %v840, 1e-05
    %v843 = vrsqrt.pop %v842
    %v844 = vmul.f32 %v843, %v842
    %v845 = vmul.f32 %v844, %v843
    %v846 = vmul.f32 0.5, %v845
    %v847 = vsub.f32 1.5, %v846
    %v848 = vmul.f32 %v843, %v847
    %vm849 = vweird.f32 %v842
    %vm850 = vweird.f32 %v843
    %vm851 = vmor %vm849, %vm850
    %v852 = vsel %vm851, %v843, %v848
    %v853 = vmul.f32 %v841, %v852
    %855 = vset.pattern.permute.xlu0 0
    %856 = vperm.xlu0 %855, %v853
    %v857 = vpop.permute.xlu0 %856
    %v859 = vmul.f32 %v831, %v857
    %v860 = vmul.f32 %v832, %v857
    %v861 = vld [vmem:[%s7] sm:$0xff]
    %863 = vset.pattern.permute.xlu0 0
    %864 = vperm.xlu0 %863, %v861
    %v865 = vpop.permute.xlu0 %864
    %v867 = vadd.f32 %v859, %v865
    %v868 = vadd.f32 %v860, %v865
    %v869 = vmul.f32 %v867, 0.5
    %v870 = vmul.f32 %v868, 0.5
    %v871 = vmul.f32 %v867, 0.70710677
    %v872 = vmul.f32 %v868, 0.70710677
    %vm873 = vcmp.ge.f32.partialorder %v871, 0.0
    %vm874 = vcmp.ge.f32.partialorder %v872, 0.0
    %v875 = vsel %vm873, 1.0, -1.0
    %v876 = vsel %vm874, 1.0, -1.0
    %v877 = vand.u32 2147483647, %v871
    %v878 = vand.u32 2147483647, %v872
    %v879 = vmul.f32 %v877, 0.3275911
    %v880 = vmul.f32 %v878, 0.3275911
    %v881 = vadd.f32 %v879, 1.0
    %v882 = vadd.f32 %v880, 1.0
    %v883 = vrcp.pop %v881
    %v884 = vmul.f32 %v881, %v883
    %v885 = vsub.f32 1.0, %v884
    %v886 = vmul.f32 %v883, %v885
    %v887 = vadd.f32 %v883, %v886
    %vm888 = vweird.f32 %v881
    %vm889 = vweird.f32 %v883
    %vm890 = vmor %vm888, %vm889
    %v891 = vsel %vm890, %v883, %v887
    %v892 = vand.u32 2147483647, %v881
    %vm893 = vcmp.eq.f32.partialorder %v892, 8.507059e+37
    %v894 = vand.u32 %v881, 2147483648
    %v895 = vor.u32 1.1754944e-38, %v894
    %v896 = vsel %vm893, %v895, %v891
    %v897 = vmul.f32 1.0, %v896
    %v898 = vrcp.pop %v882
    %v899 = vmul.f32 %v882, %v898
    %v900 = vsub.f32 1.0, %v899
    %v901 = vmul.f32 %v898, %v900
    %v902 = vadd.f32 %v898, %v901
    %vm903 = vweird.f32 %v882
    %vm904 = vweird.f32 %v898
    %vm905 = vmor %vm903, %vm904
    %v906 = vsel %vm905, %v898, %v902
    %v907 = vand.u32 2147483647, %v882
    %vm908 = vcmp.eq.f32.partialorder %v907, 8.507059e+37
    %v909 = vand.u32 %v882, 2147483648
    %v910 = vor.u32 1.1754944e-38, %v909
    %v911 = vsel %vm908, %v910, %v906
    %v912 = vmul.f32 1.0, %v911
    %v913 = vmul.f32 %v897, 1.0614054
    %v914 = vmul.f32 %v912, 1.0614054
    %v915 = vadd.f32 %v913, -1.4531521
    %v916 = vadd.f32 %v914, -1.4531521
    %v917 = vmul.f32 %v897, %v915
    %v918 = vmul.f32 %v912, %v916
    %v919 = vadd.f32 %v917, 1.4214138
    %v920 = vadd.f32 %v918, 1.4214138
    %v921 = vmul.f32 %v897, %v919
    %v922 = vmul.f32 %v912, %v920
    %v923 = vadd.f32 %v921, -0.28449672
    %v924 = vadd.f32 %v922, -0.28449672
    %v925 = vmul.f32 %v897, %v923
    %v926 = vmul.f32 %v912, %v924
    %v927 = vadd.f32 %v925, 0.2548296
    %v928 = vadd.f32 %v926, 0.2548296
    %v929 = vmul.f32 %v897, %v927
    %v930 = vmul.f32 %v912, %v928
    %v931 = vsub.f32 0.0, %v877
    %v932 = vsub.f32 0.0, %v878
    %v933 = vmul.f32 %v931, %v877
    %v934 = vmul.f32 %v932, %v878
    %v935 = vmul.f32 %v933, 1.442695
    %v936 = vpow.pop %v935
    %v937 = vmul.f32 %v934, 1.442695
    %v938 = vpow.pop %v937
    %v939 = vmul.f32 %v929, %v936
    %v940 = vmul.f32 %v930, %v938
    %v941 = vsub.f32 1.0, %v939
    %v942 = vsub.f32 1.0, %v940
    %v943 = vmul.f32 %v875, %v941
    %v944 = vmul.f32 %v876, %v942
    %v945 = vadd.f32 %v943, 1.0
    %v946 = vadd.f32 %v944, 1.0
    %v947 = vmul.f32 %v869, %v945
    %v948 = vmul.f32 %v870, %v946
    %v949 = vmul.f32 %v947, %v230
    %v950 = vmul.f32 %v948, %v231
    %v951 = vld [vmem:[%s9] sm:$0xf]
    %952 = vst [vmem:[#allocation1] ss:$2 sm:$0xff] %v41
    %v953 = vld.sshfl [vmem:[#allocation1] sm:$0xff pattern:$0x75316420]
    %v954 = vld.sshfl [vmem:[#allocation1 + $0x8] sm:$0xff pattern:$0x75316420]
    %v957 = vpack.c.bf16 %v953, %v953
    %v958 = vpack.c.bf16 %v954, %v954
    %959 = vrot.lane.b32.xlu0 %v949, 11
    %v960 = vpop.permute.xlu0 %959
    %961 = vrot.lane.b32.xlu0 %v950, 11
    %v962 = vpop.permute.xlu0 %961
    %v963 = vsel %vm377, %v960, %v962
    %v964 = vsel %vm377, %v962, %v960
    %v965 = vpack.c.bf16 %v964, %v964
    %v966 = vpack.c.bf16 %v963, %v963
    %v967 = vld [vmem:[%s8] sm:$0xf]
    %vm968 = vcmask 64512
    %v970 = vsel %vm968, %v967, 0
    %v973 = vsel %vm54, %v965, 0
    %v976 = vsel %vm54, %v966, 0
    %978 = vmatpush.bf16.msra.mxu0 0
    %979 = vmatpush.bf16.msra.mxu0 0
    %980 = vmatpush.bf16.msra.mxu0 0
    %981 = vmatpush.bf16.msra.mxu0 0
    %982 = vmatpush.bf16.msra.mxu0 0
    %983 = vmatpush.bf16.msra.mxu0 0
    %984 = vmatpush.bf16.msra.mxu0 0
    %985 = vmatpush.bf16.msra.mxu0 %v973
    %986 = vmatmul.bf16.gmra.mxu0 %v970
    %v987 = vpop.f32.mrf.mxu0
    %v988 = vadd.f32 0.0, %v987
    %v989 = vpop.f32.mrf.mxu0
    %990 = vdwg.mxu0
    %991 = vmatpush.bf16.msra.mxu0 0
    %992 = vmatpush.bf16.msra.mxu0 0
    %993 = vmatpush.bf16.msra.mxu0 0
    %994 = vmatpush.bf16.msra.mxu0 0
    %995 = vmatpush.bf16.msra.mxu0 0
    %996 = vmatpush.bf16.msra.mxu0 0
    %997 = vmatpush.bf16.msra.mxu0 0
    %998 = vmatpush.bf16.msra.mxu0 %v976
    %999 = vmatmul.bf16.gmra.mxu0 %v970
    %v1000 = vpop.f32.mrf.mxu0
    %v1001 = vadd.f32 0.0, %v1000
    %v1002 = vpop.f32.mrf.mxu0
    %1003 = vdwg.mxu0
    %v1005 = vsel %vm400, %v951, 0
    %v1008 = vsel %vm404, %v957, 0
    %v1011 = vsel %vm404, %v958, 0
    %1013 = vmatpush.bf16.msra.mxu0 0
    %1014 = vmatpush.bf16.msra.mxu0 0
    %1015 = vmatpush.bf16.msra.mxu0 0
    %1016 = vmatpush.bf16.msra.mxu0 0
    %1017 = vmatpush.bf16.msra.mxu0 0
    %1018 = vmatpush.bf16.msra.mxu0 0
    %1019 = vmatpush.bf16.msra.mxu0 0
    %1020 = vmatpush.bf16.msra.mxu0 %v1008
    %1021 = vmatmul.bf16.gmra.mxu0 %v1005
    %v1022 = vpop.f32.mrf.mxu0
    %v1023 = vadd.f32 %v988, %v1022
    %v1024 = vpop.f32.mrf.mxu0
    %1025 = vdwg.mxu0
    %1026 = vmatpush.bf16.msra.mxu0 0
    %1027 = vmatpush.bf16.msra.mxu0 0
    %1028 = vmatpush.bf16.msra.mxu0 0
    %1029 = vmatpush.bf16.msra.mxu0 0
    %1030 = vmatpush.bf16.msra.mxu0 0
    %1031 = vmatpush.bf16.msra.mxu0 0
    %1032 = vmatpush.bf16.msra.mxu0 0
    %1033 = vmatpush.bf16.msra.mxu0 %v1011
    %1034 = vmatmul.bf16.gmra.mxu0 %v1005
    %v1035 = vpop.f32.mrf.mxu0
    %v1036 = vadd.f32 %v1001, %v1035
    %v1037 = vpop.f32.mrf.mxu0
    %1038 = vdwg.mxu0
    %1039 = vrot.lane.b32.xlu0 %v949, 10
    %v1040 = vpop.permute.xlu0 %1039
    %1041 = vrot.lane.b32.xlu0 %v950, 10
    %v1042 = vpop.permute.xlu0 %1041
    %v1043 = vsel %vm393, %v1040, %v1042
    %v1044 = vsel %vm393, %v1042, %v1040
    %v1045 = vpack.c.bf16 %v1044, %v1044
    %v1046 = vpack.c.bf16 %v1043, %v1043
    %s1047 = scalar_lea.vmem %s8, 4
    %v1048 = vld [vmem:[%s1047] sm:$0xf]
    %v1050 = vsel %vm968, %v1048, 0
    %v1053 = vsel %vm54, %v1045, 0
    %v1056 = vsel %vm54, %v1046, 0
    %1058 = vmatpush.bf16.msra.mxu0 0
    %1059 = vmatpush.bf16.msra.mxu0 0
    %1060 = vmatpush.bf16.msra.mxu0 0
    %1061 = vmatpush.bf16.msra.mxu0 0
    %1062 = vmatpush.bf16.msra.mxu0 0
    %1063 = vmatpush.bf16.msra.mxu0 0
    %1064 = vmatpush.bf16.msra.mxu0 0
    %1065 = vmatpush.bf16.msra.mxu0 %v1053
    %1066 = vmatmul.bf16.gmra.mxu0 %v1050
    %v1067 = vpop.f32.mrf.mxu0
    %v1068 = vadd.f32 0.0, %v1067
    %v1069 = vpop.f32.mrf.mxu0
    %1070 = vdwg.mxu0
    %1071 = vmatpush.bf16.msra.mxu0 0
    %1072 = vmatpush.bf16.msra.mxu0 0
    %1073 = vmatpush.bf16.msra.mxu0 0
    %1074 = vmatpush.bf16.msra.mxu0 0
    %1075 = vmatpush.bf16.msra.mxu0 0
    %1076 = vmatpush.bf16.msra.mxu0 0
    %1077 = vmatpush.bf16.msra.mxu0 0
    %1078 = vmatpush.bf16.msra.mxu0 %v1056
    %1079 = vmatmul.bf16.gmra.mxu0 %v1050
    %v1080 = vpop.f32.mrf.mxu0
    %v1081 = vadd.f32 0.0, %v1080
    %v1082 = vpop.f32.mrf.mxu0
    %1083 = vdwg.mxu0
    %v1084 = vadd.f32 %v1023, %v1068
    %v1085 = vadd.f32 %v1036, %v1081
    %1086 = vrot.lane.b32.xlu0 %v949, 9
    %v1087 = vpop.permute.xlu0 %1086
    %1088 = vrot.lane.b32.xlu0 %v950, 9
    %v1089 = vpop.permute.xlu0 %1088
    %vm1090 = vcmp.lt.s32.totalorder %v376, 9
    %v1091 = vsel %vm1090, %v1087, %v1089
    %v1092 = vsel %vm1090, %v1089, %v1087
    %v1093 = vpack.c.bf16 %v1092, %v1092
    %v1094 = vpack.c.bf16 %v1091, %v1091
    %s1095 = scalar_lea.vmem %s8, 8
    %v1096 = vld [vmem:[%s1095] sm:$0xf]
    %v1098 = vsel %vm968, %v1096, 0
    %v1101 = vsel %vm54, %v1093, 0
    %v1104 = vsel %vm54, %v1094, 0
    %1106 = vmatpush.bf16.msra.mxu0 0
    %1107 = vmatpush.bf16.msra.mxu0 0
    %1108 = vmatpush.bf16.msra.mxu0 0
    %1109 = vmatpush.bf16.msra.mxu0 0
    %1110 = vmatpush.bf16.msra.mxu0 0
    %1111 = vmatpush.bf16.msra.mxu0 0
    %1112 = vmatpush.bf16.msra.mxu0 0
    %1113 = vmatpush.bf16.msra.mxu0 %v1101
    %1114 = vmatmul.bf16.gmra.mxu0 %v1098
    %v1115 = vpop.f32.mrf.mxu0
    %v1116 = vadd.f32 0.0, %v1115
    %v1117 = vpop.f32.mrf.mxu0
    %1118 = vdwg.mxu0
    %1119 = vmatpush.bf16.msra.mxu0 0
    %1120 = vmatpush.bf16.msra.mxu0 0
    %1121 = vmatpush.bf16.msra.mxu0 0
    %1122 = vmatpush.bf16.msra.mxu0 0
    %1123 = vmatpush.bf16.msra.mxu0 0
    %1124 = vmatpush.bf16.msra.mxu0 0
    %1125 = vmatpush.bf16.msra.mxu0 0
    %1126 = vmatpush.bf16.msra.mxu0 %v1104
    %1127 = vmatmul.bf16.gmra.mxu0 %v1098
    %v1128 = vpop.f32.mrf.mxu0
    %v1129 = vadd.f32 0.0, %v1128
    %v1130 = vpop.f32.mrf.mxu0
    %1131 = vdwg.mxu0
    %v1132 = vadd.f32 %v1084, %v1116
    %v1133 = vadd.f32 %v1085, %v1129
    %1134 = vrot.lane.b32.xlu0 %v949, 1
    %v1135 = vpop.permute.xlu0 %1134
    %1136 = vrot.lane.b32.xlu0 %v950, 1
    %v1137 = vpop.permute.xlu0 %1136
    %v1138 = vsel %vm534, %v1135, %v1137
    %v1139 = vsel %vm534, %v1137, %v1135
    %v1140 = vpack.c.bf16 %v1139, %v1139
    %v1141 = vpack.c.bf16 %v1138, %v1138
    %s1142 = scalar_lea.vmem %s8, 12
    %v1143 = vld [vmem:[%s1142] sm:$0xf]
    %v1145 = vsel %vm968, %v1143, 0
    %v1148 = vsel %vm54, %v1140, 0
    %v1151 = vsel %vm54, %v1141, 0
    %1153 = vmatpush.bf16.msra.mxu0 0
    %1154 = vmatpush.bf16.msra.mxu0 0
    %1155 = vmatpush.bf16.msra.mxu0 0
    %1156 = vmatpush.bf16.msra.mxu0 0
    %1157 = vmatpush.bf16.msra.mxu0 0
    %1158 = vmatpush.bf16.msra.mxu0 0
    %1159 = vmatpush.bf16.msra.mxu0 0
    %1160 = vmatpush.bf16.msra.mxu0 %v1148
    %1161 = vmatmul.bf16.gmra.mxu0 %v1145
    %v1162 = vpop.f32.mrf.mxu0
    %v1163 = vadd.f32 0.0, %v1162
    %v1164 = vpop.f32.mrf.mxu0
    %1165 = vdwg.mxu0
    %1166 = vmatpush.bf16.msra.mxu0 0
    %1167 = vmatpush.bf16.msra.mxu0 0
    %1168 = vmatpush.bf16.msra.mxu0 0
    %1169 = vmatpush.bf16.msra.mxu0 0
    %1170 = vmatpush.bf16.msra.mxu0 0
    %1171 = vmatpush.bf16.msra.mxu0 0
    %1172 = vmatpush.bf16.msra.mxu0 0
    %1173 = vmatpush.bf16.msra.mxu0 %v1151
    %1174 = vmatmul.bf16.gmra.mxu0 %v1145
    %v1175 = vpop.f32.mrf.mxu0
    %v1176 = vadd.f32 0.0, %v1175
    %v1177 = vpop.f32.mrf.mxu0
    %1178 = vdwg.mxu0
    %v1179 = vadd.f32 %v1132, %v1163
    %v1180 = vadd.f32 %v1133, %v1176
    %v1181 = vpack.c.bf16 %v949, %v949
    %v1182 = vpack.c.bf16 %v950, %v950
    %s1183 = scalar_lea.vmem %s8, 16
    %v1184 = vld [vmem:[%s1183] sm:$0xf]
    %v1186 = vsel %vm968, %v1184, 0
    %v1189 = vsel %vm54, %v1181, 0
    %v1192 = vsel %vm54, %v1182, 0
    %1194 = vmatpush.bf16.msra.mxu0 0
    %1195 = vmatpush.bf16.msra.mxu0 0
    %1196 = vmatpush.bf16.msra.mxu0 0
    %1197 = vmatpush.bf16.msra.mxu0 0
    %1198 = vmatpush.bf16.msra.mxu0 0
    %1199 = vmatpush.bf16.msra.mxu0 0
    %1200 = vmatpush.bf16.msra.mxu0 0
    %1201 = vmatpush.bf16.msra.mxu0 %v1189
    %1202 = vmatmul.bf16.gmra.mxu0 %v1186
    %v1203 = vpop.f32.mrf.mxu0
    %v1204 = vadd.f32 0.0, %v1203
    %v1205 = vpop.f32.mrf.mxu0
    %1206 = vdwg.mxu0
    %1207 = vmatpush.bf16.msra.mxu0 0
    %1208 = vmatpush.bf16.msra.mxu0 0
    %1209 = vmatpush.bf16.msra.mxu0 0
    %1210 = vmatpush.bf16.msra.mxu0 0
    %1211 = vmatpush.bf16.msra.mxu0 0
    %1212 = vmatpush.bf16.msra.mxu0 0
    %1213 = vmatpush.bf16.msra.mxu0 0
    %1214 = vmatpush.bf16.msra.mxu0 %v1192
    %1215 = vmatmul.bf16.gmra.mxu0 %v1186
    %v1216 = vpop.f32.mrf.mxu0
    %v1217 = vadd.f32 0.0, %v1216
    %v1218 = vpop.f32.mrf.mxu0
    %1219 = vdwg.mxu0
    %v1220 = vadd.f32 %v1179, %v1204
    %v1221 = vadd.f32 %v1180, %v1217
    %1222 = vrot.lane.b32.xlu0 %v949, 127
    %v1223 = vpop.permute.xlu0 %1222
    %1224 = vrot.lane.b32.xlu0 %v950, 127
    %v1225 = vpop.permute.xlu0 %1224
    %vm1226 = vcmp.lt.s32.totalorder %v376, 127
    %v1227 = vsel %vm1226, %v1223, %v1225
    %v1228 = vsel %vm1226, %v1225, %v1223
    %v1229 = vpack.c.bf16 %v1227, %v1227
    %v1230 = vpack.c.bf16 %v1228, %v1228
    %s1231 = scalar_lea.vmem %s8, 20
    %v1232 = vld [vmem:[%s1231] sm:$0xf]
    %v1234 = vsel %vm968, %v1232, 0
    %v1237 = vsel %vm54, %v1229, 0
    %v1240 = vsel %vm54, %v1230, 0
    %1242 = vmatpush.bf16.msra.mxu0 0
    %1243 = vmatpush.bf16.msra.mxu0 0
    %1244 = vmatpush.bf16.msra.mxu0 0
    %1245 = vmatpush.bf16.msra.mxu0 0
    %1246 = vmatpush.bf16.msra.mxu0 0
    %1247 = vmatpush.bf16.msra.mxu0 0
    %1248 = vmatpush.bf16.msra.mxu0 0
    %1249 = vmatpush.bf16.msra.mxu0 %v1237
    %1250 = vmatmul.bf16.gmra.mxu0 %v1234
    %v1251 = vpop.f32.mrf.mxu0
    %v1252 = vadd.f32 0.0, %v1251
    %v1253 = vpop.f32.mrf.mxu0
    %1254 = vdwg.mxu0
    %1255 = vmatpush.bf16.msra.mxu0 0
    %1256 = vmatpush.bf16.msra.mxu0 0
    %1257 = vmatpush.bf16.msra.mxu0 0
    %1258 = vmatpush.bf16.msra.mxu0 0
    %1259 = vmatpush.bf16.msra.mxu0 0
    %1260 = vmatpush.bf16.msra.mxu0 0
    %1261 = vmatpush.bf16.msra.mxu0 0
    %1262 = vmatpush.bf16.msra.mxu0 %v1240
    %1263 = vmatmul.bf16.gmra.mxu0 %v1234
    %v1264 = vpop.f32.mrf.mxu0
    %v1265 = vadd.f32 0.0, %v1264
    %v1266 = vpop.f32.mrf.mxu0
    %1267 = vdwg.mxu0
    %v1268 = vadd.f32 %v1220, %v1252
    %v1269 = vadd.f32 %v1221, %v1265
    %1270 = vrot.lane.b32.xlu0 %v949, 119
    %v1271 = vpop.permute.xlu0 %1270
    %1272 = vrot.lane.b32.xlu0 %v950, 119
    %v1273 = vpop.permute.xlu0 %1272
    %vm1274 = vcmp.lt.s32.totalorder %v376, 119
    %v1275 = vsel %vm1274, %v1271, %v1273
    %v1276 = vsel %vm1274, %v1273, %v1271
    %v1277 = vpack.c.bf16 %v1275, %v1275
    %v1278 = vpack.c.bf16 %v1276, %v1276
    %s1279 = scalar_lea.vmem %s8, 24
    %v1280 = vld [vmem:[%s1279] sm:$0xf]
    %v1282 = vsel %vm968, %v1280, 0
    %v1285 = vsel %vm54, %v1277, 0
    %v1288 = vsel %vm54, %v1278, 0
    %1290 = vmatpush.bf16.msra.mxu0 0
    %1291 = vmatpush.bf16.msra.mxu0 0
    %1292 = vmatpush.bf16.msra.mxu0 0
    %1293 = vmatpush.bf16.msra.mxu0 0
    %1294 = vmatpush.bf16.msra.mxu0 0
    %1295 = vmatpush.bf16.msra.mxu0 0
    %1296 = vmatpush.bf16.msra.mxu0 0
    %1297 = vmatpush.bf16.msra.mxu0 %v1285
    %1298 = vmatmul.bf16.gmra.mxu0 %v1282
    %v1299 = vpop.f32.mrf.mxu0
    %v1300 = vadd.f32 0.0, %v1299
    %v1301 = vpop.f32.mrf.mxu0
    %1302 = vdwg.mxu0
    %1303 = vmatpush.bf16.msra.mxu0 0
    %1304 = vmatpush.bf16.msra.mxu0 0
    %1305 = vmatpush.bf16.msra.mxu0 0
    %1306 = vmatpush.bf16.msra.mxu0 0
    %1307 = vmatpush.bf16.msra.mxu0 0
    %1308 = vmatpush.bf16.msra.mxu0 0
    %1309 = vmatpush.bf16.msra.mxu0 0
    %1310 = vmatpush.bf16.msra.mxu0 %v1288
    %1311 = vmatmul.bf16.gmra.mxu0 %v1282
    %v1312 = vpop.f32.mrf.mxu0
    %v1313 = vadd.f32 0.0, %v1312
    %v1314 = vpop.f32.mrf.mxu0
    %1315 = vdwg.mxu0
    %v1316 = vadd.f32 %v1268, %v1300
    %v1317 = vadd.f32 %v1269, %v1313
    %1318 = vrot.lane.b32.xlu0 %v949, 118
    %v1319 = vpop.permute.xlu0 %1318
    %1320 = vrot.lane.b32.xlu0 %v950, 118
    %v1321 = vpop.permute.xlu0 %1320
    %vm1322 = vcmp.lt.s32.totalorder %v376, 118
    %v1323 = vsel %vm1322, %v1319, %v1321
    %v1324 = vsel %vm1322, %v1321, %v1319
    %v1325 = vpack.c.bf16 %v1323, %v1323
    %v1326 = vpack.c.bf16 %v1324, %v1324
    %s1327 = scalar_lea.vmem %s8, 28
    %v1328 = vld [vmem:[%s1327] sm:$0xf]
    %v1330 = vsel %vm968, %v1328, 0
    %v1333 = vsel %vm54, %v1325, 0
    %v1336 = vsel %vm54, %v1326, 0
    %1338 = vmatpush.bf16.msra.mxu0 0
    %1339 = vmatpush.bf16.msra.mxu0 0
    %1340 = vmatpush.bf16.msra.mxu0 0
    %1341 = vmatpush.bf16.msra.mxu0 0
    %1342 = vmatpush.bf16.msra.mxu0 0
    %1343 = vmatpush.bf16.msra.mxu0 0
    %1344 = vmatpush.bf16.msra.mxu0 0
    %1345 = vmatpush.bf16.msra.mxu0 %v1333
    %1346 = vmatmul.bf16.gmra.mxu0 %v1330
    %v1347 = vpop.f32.mrf.mxu0
    %v1348 = vadd.f32 0.0, %v1347
    %v1349 = vpop.f32.mrf.mxu0
    %1350 = vdwg.mxu0
    %1351 = vmatpush.bf16.msra.mxu0 0
    %1352 = vmatpush.bf16.msra.mxu0 0
    %1353 = vmatpush.bf16.msra.mxu0 0
    %1354 = vmatpush.bf16.msra.mxu0 0
    %1355 = vmatpush.bf16.msra.mxu0 0
    %1356 = vmatpush.bf16.msra.mxu0 0
    %1357 = vmatpush.bf16.msra.mxu0 0
    %1358 = vmatpush.bf16.msra.mxu0 %v1336
    %1359 = vmatmul.bf16.gmra.mxu0 %v1330
    %v1360 = vpop.f32.mrf.mxu0
    %v1361 = vadd.f32 0.0, %v1360
    %v1362 = vpop.f32.mrf.mxu0
    %1363 = vdwg.mxu0
    %v1364 = vadd.f32 %v1316, %v1348
    %v1365 = vadd.f32 %v1317, %v1361
    %1366 = vrot.lane.b32.xlu0 %v949, 117
    %v1367 = vpop.permute.xlu0 %1366
    %1368 = vrot.lane.b32.xlu0 %v950, 117
    %v1369 = vpop.permute.xlu0 %1368
    %vm1370 = vcmp.lt.s32.totalorder %v376, 117
    %v1371 = vsel %vm1370, %v1367, %v1369
    %v1372 = vsel %vm1370, %v1369, %v1367
    %v1373 = vpack.c.bf16 %v1371, %v1371
    %v1374 = vpack.c.bf16 %v1372, %v1372
    %s1375 = scalar_lea.vmem %s8, 32
    %v1376 = vld [vmem:[%s1375] sm:$0xf]
    %v1378 = vsel %vm968, %v1376, 0
    %v1381 = vsel %vm54, %v1373, 0
    %v1384 = vsel %vm54, %v1374, 0
    %1386 = vmatpush.bf16.msra.mxu0 0
    %1387 = vmatpush.bf16.msra.mxu0 0
    %1388 = vmatpush.bf16.msra.mxu0 0
    %1389 = vmatpush.bf16.msra.mxu0 0
    %1390 = vmatpush.bf16.msra.mxu0 0
    %1391 = vmatpush.bf16.msra.mxu0 0
    %1392 = vmatpush.bf16.msra.mxu0 0
    %1393 = vmatpush.bf16.msra.mxu0 %v1381
    %1394 = vmatmul.bf16.gmra.mxu0 %v1378
    %v1395 = vpop.f32.mrf.mxu0
    %v1396 = vadd.f32 0.0, %v1395
    %v1397 = vpop.f32.mrf.mxu0
    %1398 = vdwg.mxu0
    %1399 = vmatpush.bf16.msra.mxu0 0
    %1400 = vmatpush.bf16.msra.mxu0 0
    %1401 = vmatpush.bf16.msra.mxu0 0
    %1402 = vmatpush.bf16.msra.mxu0 0
    %1403 = vmatpush.bf16.msra.mxu0 0
    %1404 = vmatpush.bf16.msra.mxu0 0
    %1405 = vmatpush.bf16.msra.mxu0 0
    %1406 = vmatpush.bf16.msra.mxu0 %v1384
    %1407 = vmatmul.bf16.gmra.mxu0 %v1378
    %v1408 = vpop.f32.mrf.mxu0
    %v1409 = vadd.f32 0.0, %v1408
    %v1410 = vpop.f32.mrf.mxu0
    %1411 = vdwg.mxu0
    %v1412 = vadd.f32 %v1364, %v1396
    %v1413 = vadd.f32 %v1365, %v1409
    %v1414 = vld [vmem:[%s10] sm:$0xff]
    %1416 = vset.pattern.permute.xlu0 0
    %1417 = vperm.xlu0 %1416, %v1414
    %v1418 = vpop.permute.xlu0 %1417
    %v1420 = vadd.f32 %v1412, %v1418
    %v1421 = vadd.f32 %v1413, %v1418
    %1422 = vst [vmem:[#allocation2] sm:$0xff] %v1420
    %1423 = vst [vmem:[#allocation2 + $0x8] sm:$0xff] %v1421
    // Predicated region
    $region46: #{tpu_custom_call.1} parent=1 // pred_check
      _
    $region47: #{tpu_custom_call.1} parent=1 // pred_check_branch
      %1425 = sbr.rel (0) target = $region49
    $region48: #{tpu_custom_call.1} parent=1 // pred_region
      %1427 = vsyncadd [#allocation3], 0
      %s1429 = sshll.u32 [#allocation2], 4
      %s1430 = int_to_ptr.vmem [resolvable:$true] %s1429
      %s1431 = sshll.u32 %s11, 4
      %s1432 = int_to_ptr.hbm [resolvable:$true] %s1431
      %1434 = dma.vmem_to_hbm [thread:$0]  %s1430, 256, %s1432, [#allocation3]
    $region49: #{tpu_custom_call.1} parent=1 // pred_fallthru
      _
    // Predicated region
    $region50: #{tpu_custom_call.1} parent=1 // pred_check
      _
    $region51: #{tpu_custom_call.1} parent=1 // pred_check_branch
      %1436 = sbr.rel (0) target = $region53
    $region52: #{tpu_custom_call.1} parent=1 // pred_region
      %1438 = dma.done [#allocation3], 256
    $region53: #{tpu_custom_call.1} parent=1 // pred_fallthru
      _
    %1439 = vsyncpa [#allocation3], 1

</llo_original>
